<compile_context>
chip_gen: v6e
topology: v6e:2x2x1
jax: 0.10.0
libtpu: 0.0.40
codegen_flags: <defaults>
</compile_context>

<pallas_src>
import math
import jax
import jax.numpy as jnp
from jax import lax
from jax.experimental import pallas as pl
from jax.experimental.pallas import tpu as pltpu  # noqa: F401  (TPU backend)

# ---- model configuration (small, consistent with the module's forward) ----
INPUT_SIZE = 4
D_MODEL    = 32
NHEAD      = 4
NUM_LAYERS = 2
OUT_LEN    = 6
DFF        = 64          # dim_feedforward
B          = 2
T          = 8
DH         = D_MODEL // NHEAD
EPS        = 1e-5        # nn.LayerNorm default
OUT_PAD    = 128         # lane-dense padded output width
BT         = B * T       # folded token rows
HBT        = NHEAD * BT  # replicated K/V rows (head-major)
BIG        = 1.0e30      # additive score mask for cross-batch columns

# ---- row offsets inside the single packed (SLAB_ROWS, 128) parameter slab ----
OFF_WI   = 0                                 # (INPUT_SIZE, D_MODEL)
OFF_WQKV = 8                                 # per layer: (D_MODEL, 3*D_MODEL)
OFF_WO   = OFF_WQKV + NUM_LAYERS * D_MODEL   # per layer: (D_MODEL, D_MODEL)
OFF_W1   = OFF_WO   + NUM_LAYERS * D_MODEL   # per layer: (D_MODEL, DFF)
OFF_W2   = OFF_W1   + NUM_LAYERS * D_MODEL   # per layer: (DFF, D_MODEL)
OFF_WOUT = OFF_W2   + NUM_LAYERS * DFF       # (D_MODEL, OUT_PAD)
OFF_POS  = OFF_WOUT + D_MODEL                # (BT, D_MODEL) = tiled pos + input bias
OFF_VEC  = OFF_POS  + BT                     # per layer: (8, 128) packed vectors
OFF_BOUT = OFF_VEC  + NUM_LAYERS * 8         # (1, OUT_PAD) output bias (padded to 8 rows)
OFF_KVM  = OFF_BOUT + 8                      # (HBT, D_MODEL) head replicate mask
OFF_SEG  = OFF_KVM  + HBT                    # (HBT, HBT) per-(batch,head) segment-sum matrix
OFF_BM   = OFF_SEG  + HBT                    # (BT, HBT) same-batch mask
SLAB_ROWS = OFF_BM + BT                      # = 544


def _layer_norm(x, w, b):
    mu = jnp.mean(x, axis=-1, keepdims=True)
    var = jnp.mean((x - mu) ** 2, axis=-1, keepdims=True)
    return (x - mu) * lax.rsqrt(var + EPS) * w + b


def _masks():
    """Host-side constants (column order c = h*B*T + b*T + j)."""
    c = jnp.arange(HBT)
    d = jnp.arange(D_MODEL)
    r = jnp.arange(BT)
    kv = (c[:, None] // BT == d[None, :] // DH).astype(jnp.float32)       # (HBT, D)
    seg = (c[:, None] // T == c[None, :] // T).astype(jnp.float32)        # (HBT, HBT)
    bm = (r[:, None] // T == (c[None, :] // T) % B).astype(jnp.float32)   # (BT, HBT)
    return kv, seg, bm


# ------------------------------------ kernel ---------------------------------
def _kernel(x_ref, p_ref, out_ref):
    f32 = jnp.float32

    # Constant slices of the packed slab (static views, hoisted out of the loop).
    kv_mask  = p_ref[OFF_KVM:OFF_KVM + HBT, 0:D_MODEL]
    seg_mask = p_ref[OFF_SEG:OFF_SEG + HBT, 0:HBT]
    bm       = p_ref[OFF_BM:OFF_BM + BT, 0:HBT]
    inv_bm   = 1.0 - bm                 # 1 on cross-batch columns
    neg_mask = inv_bm * BIG             # additive -BIG on cross-batch scores

    wi   = p_ref[OFF_WI:OFF_WI + INPUT_SIZE, 0:D_MODEL]
    posb = p_ref[OFF_POS:OFF_POS + BT, 0:D_MODEL]     # tiled pos enc + input bias

    # ---------------- input projection + positional encoding -----------------
    h = jnp.dot(x_ref[...], wi, preferred_element_type=f32) + posb       # (BT, D)

    for l in range(NUM_LAYERS):                                          # static unroll
        vb = OFF_VEC + 8 * l
        bqkv = p_ref[vb + 0:vb + 1, 0:3 * D_MODEL]   # already 1/sqrt(DH)-scaled (q part)
        bo   = p_ref[vb + 1:vb + 2, 0:D_MODEL]
        ln1w = p_ref[vb + 2:vb + 3, 0:D_MODEL]
        ln1b = p_ref[vb + 3:vb + 4, 0:D_MODEL]
        b1   = p_ref[vb + 4:vb + 5, 0:DFF]
        b2   = p_ref[vb + 5:vb + 6, 0:D_MODEL]
        ln2w = p_ref[vb + 6:vb + 7, 0:D_MODEL]
        ln2b = p_ref[vb + 7:vb + 8, 0:D_MODEL]

        wqkv = p_ref[OFF_WQKV + l * D_MODEL:OFF_WQKV + (l + 1) * D_MODEL, 0:3 * D_MODEL]
        wo   = p_ref[OFF_WO   + l * D_MODEL:OFF_WO   + (l + 1) * D_MODEL, 0:D_MODEL]
        w1   = p_ref[OFF_W1   + l * D_MODEL:OFF_W1   + (l + 1) * D_MODEL, 0:DFF]
        w2   = p_ref[OFF_W2   + l * DFF    :OFF_W2   + (l + 1) * DFF,     0:D_MODEL]

        # -------- fused multi-head self-attention, whole batch at once --------
        # Fused QKV: one MXU push (N=96 fits one pass on every generation).
        qkv = jnp.dot(h, wqkv, preferred_element_type=f32) + bqkv        # (BT, 3D)
        q = qkv[:, 0:D_MODEL]
        k = qkv[:, D_MODEL:2 * D_MODEL]
        v = qkv[:, 2 * D_MODEL:3 * D_MODEL]

        # Head-replicated K/V for the whole batch: row c = h*BT + b*T + j, only
        # lanes of head h kept (kv_mask).  One concat + one VPU mul each.
        k_rep = jnp.concatenate([k] * NHEAD, axis=0) * kv_mask           # (HBT, D)
        v_rep = jnp.concatenate([v] * NHEAD, axis=0) * kv_mask

        # Scores for all (batch, head) pairs in one matmul; attention scale is
        # pre-folded into wqkv.  Cross-batch columns get -BIG before the max so
        # they exp() to exactly 0 and never pollute the softmax.
        s = lax.dot_general(q, k_rep, (((1,), (1,)), ((), ())),
                            preferred_element_type=f32) - neg_mask       # (BT, HBT)
        # Per-row max over valid columns; constant within every head segment, so
        # the per-(batch,head) softmax ratio stays exact.
        s = s - jnp.max(s, axis=-1, keepdims=True)
        p = jnp.exp(s)
        # Per-(batch,head) denominators via one matmul; +inv_bm keeps the dead
        # cross-batch segments at 1 so the reciprocal never sees 0.
        denom = jnp.dot(p, seg_mask, preferred_element_type=f32) + inv_bm
        r = pl.reciprocal(denom, approx=True)          # EUP vrcp
        r = r * (2.0 - denom * r)                      # one Newton step (cheap VPU)
        p = p * r
        attn = jnp.dot(p, v_rep, preferred_element_type=f32)             # (BT, D)
        attn = jnp.dot(attn, wo, preferred_element_type=f32) + bo
        # dropout = identity (eval mode)
        h = _layer_norm(h + attn, ln1w, ln1b)

        # --------------------------------- FFN ---------------------------------
        ff = jnp.dot(h, w1, preferred_element_type=f32) + b1
        ff = jnp.maximum(ff, 0.0)                                        # ReLU
        ff = jnp.dot(ff, w2, preferred_element_type=f32) + b2
        h = _layer_norm(h + ff, ln2w, ln2b)

    # ------- output head on ALL rows, lane-dense (BT, 128) full store --------
    wout = p_ref[OFF_WOUT:OFF_WOUT + D_MODEL, :]
    bout = p_ref[OFF_BOUT:OFF_BOUT + 1, :]
    out_ref[...] = jnp.dot(h, wout, preferred_element_type=f32) + bout


# ------------------------------- wrapper --------------------------------------
def transformer_forecaster(x, slab):
    batch, seq, feat = x.shape
    assert (batch, seq, feat) == (B, T, INPUT_SIZE)
    x2d = x.reshape(batch * seq, feat)                 # layout plumbing (host side)

    out = pl.pallas_call(
        _kernel,
        out_shape=jax.ShapeDtypeStruct((batch * seq, OUT_PAD), jnp.float32),
    )(x2d, slab)
    # Select last-token rows and real output columns in the wrapper (free).
    return out.reshape(batch, seq, OUT_PAD)[:, -1, :OUT_LEN]


# ---------------------- deterministic parameter init --------------------------
def init_params(key):
    keys = iter(jax.random.split(key, 24))

    def nrm(shape, std=0.02):
        return (std * jax.random.normal(next(keys), shape)).astype(jnp.float32)

    return dict(
        wi=nrm((INPUT_SIZE, D_MODEL)), bi=nrm((1, D_MODEL)),
        pos_enc=(0.02 * jax.random.truncated_normal(
            next(keys), -2.0, 2.0, (1, 5000, D_MODEL))).astype(jnp.float32),
        wqkv=nrm((NUM_LAYERS, D_MODEL, 3 * D_MODEL)),
        bqkv=nrm((NUM_LAYERS, 1, 3 * D_MODEL)),
        wo=nrm((NUM_LAYERS, D_MODEL, D_MODEL)), bo=nrm((NUM_LAYERS, 1, D_MODEL)),
        ln1w=jnp.ones((NUM_LAYERS, 1, D_MODEL), jnp.float32),
        ln1b=jnp.zeros((NUM_LAYERS, 1, D_MODEL), jnp.float32),
        w1=nrm((NUM_LAYERS, D_MODEL, DFF)), b1=nrm((NUM_LAYERS, 1, DFF)),
        w2=nrm((NUM_LAYERS, DFF, D_MODEL)), b2=nrm((NUM_LAYERS, 1, D_MODEL)),
        ln2w=jnp.ones((NUM_LAYERS, 1, D_MODEL), jnp.float32),
        ln2b=jnp.zeros((NUM_LAYERS, 1, D_MODEL), jnp.float32),
        wout=nrm((D_MODEL, OUT_LEN)), bout=nrm((1, OUT_LEN)),
    )


# ------- host-side packing (done once): ONE lane-dense parameter slab ---------
def pack_params(p):
    scale = 1.0 / math.sqrt(DH)
    slab = jnp.zeros((SLAB_ROWS, 128), jnp.float32)

    # input projection weight
    slab = slab.at[OFF_WI:OFF_WI + INPUT_SIZE, 0:D_MODEL].set(p["wi"])

    # fold attention scale into the q-columns of wqkv / bqkv
    wqkv = p["wqkv"].at[:, :, 0:D_MODEL].multiply(scale)
    bqkv = p["bqkv"].at[:, :, 0:D_MODEL].multiply(scale)

    for l in range(NUM_LAYERS):
        slab = slab.at[OFF_WQKV + l * D_MODEL:OFF_WQKV + (l + 1) * D_MODEL,
                       0:3 * D_MODEL].set(wqkv[l])
        slab = slab.at[OFF_WO + l * D_MODEL:OFF_WO + (l + 1) * D_MODEL,
                       0:D_MODEL].set(p["wo"][l])
        slab = slab.at[OFF_W1 + l * D_MODEL:OFF_W1 + (l + 1) * D_MODEL,
                       0:DFF].set(p["w1"][l])
        slab = slab.at[OFF_W2 + l * DFF:OFF_W2 + (l + 1) * DFF,
                       0:D_MODEL].set(p["w2"][l])
        vb = OFF_VEC + 8 * l
        slab = slab.at[vb + 0, 0:3 * D_MODEL].set(bqkv[l, 0])
        slab = slab.at[vb + 1, 0:D_MODEL].set(p["bo"][l, 0])
        slab = slab.at[vb + 2, 0:D_MODEL].set(p["ln1w"][l, 0])
        slab = slab.at[vb + 3, 0:D_MODEL].set(p["ln1b"][l, 0])
        slab = slab.at[vb + 4, 0:DFF].set(p["b1"][l, 0])
        slab = slab.at[vb + 5, 0:D_MODEL].set(p["b2"][l, 0])
        slab = slab.at[vb + 6, 0:D_MODEL].set(p["ln2w"][l, 0])
        slab = slab.at[vb + 7, 0:D_MODEL].set(p["ln2b"][l, 0])

    # lane-padded output head
    slab = slab.at[OFF_WOUT:OFF_WOUT + D_MODEL, 0:OUT_LEN].set(p["wout"])
    slab = slab.at[OFF_BOUT, 0:OUT_LEN].set(p["bout"][0])

    # pre-tiled positional encoding + input bias folded together
    pos = p["pos_enc"][0, :T, :]                            # (T, D)
    posb = jnp.tile(pos, (B, 1)) + p["bi"]                  # (BT, D)
    slab = slab.at[OFF_POS:OFF_POS + BT, 0:D_MODEL].set(posb)

    # precomputed attention masks
    kv, seg, bm = _masks()
    slab = slab.at[OFF_KVM:OFF_KVM + HBT, 0:D_MODEL].set(kv)
    slab = slab.at[OFF_SEG:OFF_SEG + HBT, 0:HBT].set(seg)
    slab = slab.at[OFF_BM:OFF_BM + BT, 0:HBT].set(bm)
    return slab


# ---------------------- pure-JAX reference (same math) ------------------------
def reference(x, p):
    bsz, seq, _ = x.shape
    h = x @ p["wi"] + p["bi"]
    h = h + p["pos_enc"][:, :seq, :]
    for l in range(NUM_LAYERS):
        qkv = h @ p["wqkv"][l] + p["bqkv"][l]
        q, k, v = jnp.split(qkv, 3, axis=-1)
        qh = q.reshape(bsz, seq, NHEAD, DH).transpose(0, 2, 1, 3)
        kh = k.reshape(bsz, seq, NHEAD, DH).transpose(0, 2, 1, 3)
        vh = v.reshape(bsz, seq, NHEAD, DH).transpose(0, 2, 1, 3)
        s = jnp.einsum('bhqd,bhkd->bhqk', qh, kh) / math.sqrt(DH)
        a = jax.nn.softmax(s, axis=-1)
        o = jnp.einsum('bhqk,bhkd->bhqd', a, vh).transpose(0, 2, 1, 3).reshape(bsz, seq, D_MODEL)
        o = o @ p["wo"][l] + p["bo"][l]
        h = _layer_norm(h + o, p["ln1w"][l], p["ln1b"][l])
        ff = jax.nn.relu(h @ p["w1"][l] + p["b1"][l]) @ p["w2"][l] + p["b2"][l]
        h = _layer_norm(h + ff, p["ln2w"][l], p["ln2b"][l])
    last = h[:, -1, :]
    return last @ p["wout"] + p["bout"]


if __name__ == "__main__":
    key = jax.random.PRNGKey(0)
    kx, kp = jax.random.split(key)
    x = jax.random.normal(kx, (B, T, INPUT_SIZE), dtype=jnp.float32)
    params = init_params(kp)
    slab = pack_params(params)

    out = transformer_forecaster(x, slab)
    jax.block_until_ready(out)

    out_ref = reference(x, params)
    assert out.shape == (B, OUT_LEN)
    assert jnp.allclose(out, out_ref, atol=1e-4, rtol=1e-4)

    print("KERNEL_OK")
</pallas_src>

<mosaic_0001>
module attributes {stable_mosaic.version = 11 : i64} {
  func.func @_kernel(%arg0: memref<16x4xf32, #tpu.memory_space<vmem>>, %arg1: memref<544x128xf32, #tpu.memory_space<vmem>>, %arg2: memref<16x128xf32, #tpu.memory_space<vmem>>) attributes {dimension_semantics = [], scalar_prefetch = 0 : i64, scratch_operands = 0 : i64, tpu.core_type = #tpu.core_type<tc>} {
    %c400 = arith.constant 400 : index
    %c0 = arith.constant 0 : index
    %0 = vector.load %arg1[%c400, %c0] : memref<544x128xf32, #tpu.memory_space<vmem>>, vector<64x32xf32>
    %c464 = arith.constant 464 : index
    %c0_0 = arith.constant 0 : index
    %1 = vector.load %arg1[%c464, %c0_0] : memref<544x128xf32, #tpu.memory_space<vmem>>, vector<64x64xf32>
    %c528 = arith.constant 528 : index
    %c0_1 = arith.constant 0 : index
    %2 = vector.load %arg1[%c528, %c0_1] : memref<544x128xf32, #tpu.memory_space<vmem>>, vector<16x64xf32>
    %cst = arith.constant 1.000000e+00 : f32
    %3 = vector.broadcast %cst : f32 to vector<16x64xf32>
    %4 = arith.subf %3, %2 : vector<16x64xf32>
    %cst_2 = arith.constant 1.000000e+30 : f32
    %5 = vector.broadcast %cst_2 : f32 to vector<16x64xf32>
    %6 = arith.mulf %4, %5 : vector<16x64xf32>
    %c0_3 = arith.constant 0 : index
    %c0_4 = arith.constant 0 : index
    %7 = vector.load %arg1[%c0_3, %c0_4] : memref<544x128xf32, #tpu.memory_space<vmem>>, vector<4x32xf32>
    %c360 = arith.constant 360 : index
    %c0_5 = arith.constant 0 : index
    %8 = vector.load %arg1[%c360, %c0_5] : memref<544x128xf32, #tpu.memory_space<vmem>>, vector<16x32xf32>
    %c0_6 = arith.constant 0 : index
    %c0_7 = arith.constant 0 : index
    %9 = vector.load %arg0[%c0_6, %c0_7] : memref<16x4xf32, #tpu.memory_space<vmem>>, vector<16x4xf32>
    %cst_8 = arith.constant dense<0.000000e+00> : vector<16x32xf32>
    %10 = tpu.matmul %9, %7, %cst_8 {dimension_numbers = #tpu.dot_dimension_numbers<[1], [0], [0], [1], [0, 0, 1, 1], [], []>} : vector<16x4xf32>, vector<4x32xf32>, vector<16x32xf32> -> vector<16x32xf32>
    %11 = arith.addf %10, %8 : vector<16x32xf32>
    %c376 = arith.constant 376 : index
    %c0_9 = arith.constant 0 : index
    %12 = vector.load %arg1[%c376, %c0_9] : memref<544x128xf32, #tpu.memory_space<vmem>>, vector<1x96xf32>
    %c377 = arith.constant 377 : index
    %c0_10 = arith.constant 0 : index
    %13 = vector.load %arg1[%c377, %c0_10] : memref<544x128xf32, #tpu.memory_space<vmem>>, vector<1x32xf32>
    %c378 = arith.constant 378 : index
    %c0_11 = arith.constant 0 : index
    %14 = vector.load %arg1[%c378, %c0_11] : memref<544x128xf32, #tpu.memory_space<vmem>>, vector<1x32xf32>
    %c379 = arith.constant 379 : index
    %c0_12 = arith.constant 0 : index
    %15 = vector.load %arg1[%c379, %c0_12] : memref<544x128xf32, #tpu.memory_space<vmem>>, vector<1x32xf32>
    %c380 = arith.constant 380 : index
    %c0_13 = arith.constant 0 : index
    %16 = vector.load %arg1[%c380, %c0_13] : memref<544x128xf32, #tpu.memory_space<vmem>>, vector<1x64xf32>
    %c381 = arith.constant 381 : index
    %c0_14 = arith.constant 0 : index
    %17 = vector.load %arg1[%c381, %c0_14] : memref<544x128xf32, #tpu.memory_space<vmem>>, vector<1x32xf32>
    %c382 = arith.constant 382 : index
    %c0_15 = arith.constant 0 : index
    %18 = vector.load %arg1[%c382, %c0_15] : memref<544x128xf32, #tpu.memory_space<vmem>>, vector<1x32xf32>
    %c383 = arith.constant 383 : index
    %c0_16 = arith.constant 0 : index
    %19 = vector.load %arg1[%c383, %c0_16] : memref<544x128xf32, #tpu.memory_space<vmem>>, vector<1x32xf32>
    %c8 = arith.constant 8 : index
    %c0_17 = arith.constant 0 : index
    %20 = vector.load %arg1[%c8, %c0_17] : memref<544x128xf32, #tpu.memory_space<vmem>>, vector<32x96xf32>
    %c72 = arith.constant 72 : index
    %c0_18 = arith.constant 0 : index
    %21 = vector.load %arg1[%c72, %c0_18] : memref<544x128xf32, #tpu.memory_space<vmem>>, vector<32x32xf32>
    %c136 = arith.constant 136 : index
    %c0_19 = arith.constant 0 : index
    %22 = vector.load %arg1[%c136, %c0_19] : memref<544x128xf32, #tpu.memory_space<vmem>>, vector<32x64xf32>
    %c200 = arith.constant 200 : index
    %c0_20 = arith.constant 0 : index
    %23 = vector.load %arg1[%c200, %c0_20] : memref<544x128xf32, #tpu.memory_space<vmem>>, vector<64x32xf32>
    %cst_21 = arith.constant dense<0.000000e+00> : vector<16x96xf32>
    %24 = tpu.matmul %11, %20, %cst_21 {dimension_numbers = #tpu.dot_dimension_numbers<[1], [0], [0], [1], [0, 0, 1, 1], [], []>} : vector<16x32xf32>, vector<32x96xf32>, vector<16x96xf32> -> vector<16x96xf32>
    %25 = vector.broadcast %12 : vector<1x96xf32> to vector<16x96xf32>
    %26 = arith.addf %24, %25 : vector<16x96xf32>
    %27 = vector.extract_strided_slice %26 {offsets = [0, 0], sizes = [16, 32], strides = [1, 1]} : vector<16x96xf32> to vector<16x32xf32>
    %28 = vector.extract_strided_slice %26 {offsets = [0, 32], sizes = [16, 32], strides = [1, 1]} : vector<16x96xf32> to vector<16x32xf32>
    %29 = vector.extract_strided_slice %26 {offsets = [0, 64], sizes = [16, 32], strides = [1, 1]} : vector<16x96xf32> to vector<16x32xf32>
    %30 = tpu.concatenate %28, %28, %28, %28 in 0 : vector<16x32xf32>, vector<16x32xf32>, vector<16x32xf32>, vector<16x32xf32> -> vector<64x32xf32>
    %31 = arith.mulf %30, %0 : vector<64x32xf32>
    %32 = tpu.concatenate %29, %29, %29, %29 in 0 : vector<16x32xf32>, vector<16x32xf32>, vector<16x32xf32>, vector<16x32xf32> -> vector<64x32xf32>
    %33 = arith.mulf %32, %0 : vector<64x32xf32>
    %cst_22 = arith.constant dense<0.000000e+00> : vector<16x64xf32>
    %34 = tpu.matmul %27, %31, %cst_22 {dimension_numbers = #tpu.dot_dimension_numbers<[1], [1], [0], [0], [0, 0, 1, 0], [], []>} : vector<16x32xf32>, vector<64x32xf32>, vector<16x64xf32> -> vector<16x64xf32>
    %35 = arith.subf %34, %6 : vector<16x64xf32>
    %cst_23 = arith.constant dense<0xFF800000> : vector<16xf32>
    %36 = vector.multi_reduction <maximumf>, %35, %cst_23 [1] : vector<16x64xf32> to vector<16xf32>
    %37 = vector.shape_cast %36 : vector<16xf32> to vector<16x1xf32>
    %38 = vector.broadcast %37 : vector<16x1xf32> to vector<16x64xf32>
    %39 = arith.subf %35, %38 : vector<16x64xf32>
    %40 = math.exp %39 : vector<16x64xf32>
    %cst_24 = arith.constant dense<0.000000e+00> : vector<16x64xf32>
    %41 = tpu.matmul %40, %1, %cst_24 {dimension_numbers = #tpu.dot_dimension_numbers<[1], [0], [0], [1], [0, 0, 1, 1], [], []>} : vector<16x64xf32>, vector<64x64xf32>, vector<16x64xf32> -> vector<16x64xf32>
    %42 = arith.addf %41, %4 : vector<16x64xf32>
    %43 = tpu.reciprocal %42 {approx = true} : vector<16x64xf32> -> vector<16x64xf32>
    %44 = arith.mulf %42, %43 : vector<16x64xf32>
    %cst_25 = arith.constant 2.000000e+00 : f32
    %45 = vector.broadcast %cst_25 : f32 to vector<16x64xf32>
    %46 = arith.subf %45, %44 : vector<16x64xf32>
    %47 = arith.mulf %43, %46 : vector<16x64xf32>
    %48 = arith.mulf %40, %47 : vector<16x64xf32>
    %cst_26 = arith.constant dense<0.000000e+00> : vector<16x32xf32>
    %49 = tpu.matmul %48, %33, %cst_26 {dimension_numbers = #tpu.dot_dimension_numbers<[1], [0], [0], [1], [0, 0, 1, 1], [], []>} : vector<16x64xf32>, vector<64x32xf32>, vector<16x32xf32> -> vector<16x32xf32>
    %cst_27 = arith.constant dense<0.000000e+00> : vector<16x32xf32>
    %50 = tpu.matmul %49, %21, %cst_27 {dimension_numbers = #tpu.dot_dimension_numbers<[1], [0], [0], [1], [0, 0, 1, 1], [], []>} : vector<16x32xf32>, vector<32x32xf32>, vector<16x32xf32> -> vector<16x32xf32>
    %51 = vector.broadcast %13 : vector<1x32xf32> to vector<16x32xf32>
    %52 = arith.addf %50, %51 : vector<16x32xf32>
    %53 = arith.addf %11, %52 : vector<16x32xf32>
    %cst_28 = arith.constant dense<0.000000e+00> : vector<16xf32>
    %54 = vector.multi_reduction <add>, %53, %cst_28 [1] : vector<16x32xf32> to vector<16xf32>
    %55 = vector.shape_cast %54 : vector<16xf32> to vector<16x1xf32>
    %cst_29 = arith.constant 3.200000e+01 : f32
    %56 = vector.broadcast %cst_29 : f32 to vector<16x1xf32>
    %57 = arith.divf %55, %56 : vector<16x1xf32>
    %58 = vector.broadcast %57 : vector<16x1xf32> to vector<16x32xf32>
    %59 = arith.subf %53, %58 : vector<16x32xf32>
    %60 = arith.mulf %59, %59 : vector<16x32xf32>
    %cst_30 = arith.constant dense<0.000000e+00> : vector<16xf32>
    %61 = vector.multi_reduction <add>, %60, %cst_30 [1] : vector<16x32xf32> to vector<16xf32>
    %62 = vector.shape_cast %61 : vector<16xf32> to vector<16x1xf32>
    %cst_31 = arith.constant 3.200000e+01 : f32
    %63 = vector.broadcast %cst_31 : f32 to vector<16x1xf32>
    %64 = arith.divf %62, %63 : vector<16x1xf32>
    %65 = vector.broadcast %57 : vector<16x1xf32> to vector<16x32xf32>
    %66 = arith.subf %53, %65 : vector<16x32xf32>
    %cst_32 = arith.constant 9.99999974E-6 : f32
    %67 = vector.broadcast %cst_32 : f32 to vector<16x1xf32>
    %68 = arith.addf %64, %67 : vector<16x1xf32>
    %69 = math.rsqrt %68 : vector<16x1xf32>
    %70 = vector.broadcast %69 : vector<16x1xf32> to vector<16x32xf32>
    %71 = arith.mulf %66, %70 : vector<16x32xf32>
    %72 = vector.broadcast %14 : vector<1x32xf32> to vector<16x32xf32>
    %73 = arith.mulf %71, %72 : vector<16x32xf32>
    %74 = vector.broadcast %15 : vector<1x32xf32> to vector<16x32xf32>
    %75 = arith.addf %73, %74 : vector<16x32xf32>
    %cst_33 = arith.constant dense<0.000000e+00> : vector<16x64xf32>
    %76 = tpu.matmul %75, %22, %cst_33 {dimension_numbers = #tpu.dot_dimension_numbers<[1], [0], [0], [1], [0, 0, 1, 1], [], []>} : vector<16x32xf32>, vector<32x64xf32>, vector<16x64xf32> -> vector<16x64xf32>
    %77 = vector.broadcast %16 : vector<1x64xf32> to vector<16x64xf32>
    %78 = arith.addf %76, %77 : vector<16x64xf32>
    %cst_34 = arith.constant 0.000000e+00 : f32
    %79 = vector.broadcast %cst_34 : f32 to vector<16x64xf32>
    %80 = arith.maximumf %78, %79 : vector<16x64xf32>
    %cst_35 = arith.constant dense<0.000000e+00> : vector<16x32xf32>
    %81 = tpu.matmul %80, %23, %cst_35 {dimension_numbers = #tpu.dot_dimension_numbers<[1], [0], [0], [1], [0, 0, 1, 1], [], []>} : vector<16x64xf32>, vector<64x32xf32>, vector<16x32xf32> -> vector<16x32xf32>
    %82 = vector.broadcast %17 : vector<1x32xf32> to vector<16x32xf32>
    %83 = arith.addf %81, %82 : vector<16x32xf32>
    %84 = arith.addf %75, %83 : vector<16x32xf32>
    %cst_36 = arith.constant dense<0.000000e+00> : vector<16xf32>
    %85 = vector.multi_reduction <add>, %84, %cst_36 [1] : vector<16x32xf32> to vector<16xf32>
    %86 = vector.shape_cast %85 : vector<16xf32> to vector<16x1xf32>
    %cst_37 = arith.constant 3.200000e+01 : f32
    %87 = vector.broadcast %cst_37 : f32 to vector<16x1xf32>
    %88 = arith.divf %86, %87 : vector<16x1xf32>
    %89 = vector.broadcast %88 : vector<16x1xf32> to vector<16x32xf32>
    %90 = arith.subf %84, %89 : vector<16x32xf32>
    %91 = arith.mulf %90, %90 : vector<16x32xf32>
    %cst_38 = arith.constant dense<0.000000e+00> : vector<16xf32>
    %92 = vector.multi_reduction <add>, %91, %cst_38 [1] : vector<16x32xf32> to vector<16xf32>
    %93 = vector.shape_cast %92 : vector<16xf32> to vector<16x1xf32>
    %cst_39 = arith.constant 3.200000e+01 : f32
    %94 = vector.broadcast %cst_39 : f32 to vector<16x1xf32>
    %95 = arith.divf %93, %94 : vector<16x1xf32>
    %96 = vector.broadcast %88 : vector<16x1xf32> to vector<16x32xf32>
    %97 = arith.subf %84, %96 : vector<16x32xf32>
    %cst_40 = arith.constant 9.99999974E-6 : f32
    %98 = vector.broadcast %cst_40 : f32 to vector<16x1xf32>
    %99 = arith.addf %95, %98 : vector<16x1xf32>
    %100 = math.rsqrt %99 : vector<16x1xf32>
    %101 = vector.broadcast %100 : vector<16x1xf32> to vector<16x32xf32>
    %102 = arith.mulf %97, %101 : vector<16x32xf32>
    %103 = vector.broadcast %18 : vector<1x32xf32> to vector<16x32xf32>
    %104 = arith.mulf %102, %103 : vector<16x32xf32>
    %105 = vector.broadcast %19 : vector<1x32xf32> to vector<16x32xf32>
    %106 = arith.addf %104, %105 : vector<16x32xf32>
    %c384 = arith.constant 384 : index
    %c0_41 = arith.constant 0 : index
    %107 = vector.load %arg1[%c384, %c0_41] : memref<544x128xf32, #tpu.memory_space<vmem>>, vector<1x96xf32>
    %c385 = arith.constant 385 : index
    %c0_42 = arith.constant 0 : index
    %108 = vector.load %arg1[%c385, %c0_42] : memref<544x128xf32, #tpu.memory_space<vmem>>, vector<1x32xf32>
    %c386 = arith.constant 386 : index
    %c0_43 = arith.constant 0 : index
    %109 = vector.load %arg1[%c386, %c0_43] : memref<544x128xf32, #tpu.memory_space<vmem>>, vector<1x32xf32>
    %c387 = arith.constant 387 : index
    %c0_44 = arith.constant 0 : index
    %110 = vector.load %arg1[%c387, %c0_44] : memref<544x128xf32, #tpu.memory_space<vmem>>, vector<1x32xf32>
    %c388 = arith.constant 388 : index
    %c0_45 = arith.constant 0 : index
    %111 = vector.load %arg1[%c388, %c0_45] : memref<544x128xf32, #tpu.memory_space<vmem>>, vector<1x64xf32>
    %c389 = arith.constant 389 : index
    %c0_46 = arith.constant 0 : index
    %112 = vector.load %arg1[%c389, %c0_46] : memref<544x128xf32, #tpu.memory_space<vmem>>, vector<1x32xf32>
    %c390 = arith.constant 390 : index
    %c0_47 = arith.constant 0 : index
    %113 = vector.load %arg1[%c390, %c0_47] : memref<544x128xf32, #tpu.memory_space<vmem>>, vector<1x32xf32>
    %c391 = arith.constant 391 : index
    %c0_48 = arith.constant 0 : index
    %114 = vector.load %arg1[%c391, %c0_48] : memref<544x128xf32, #tpu.memory_space<vmem>>, vector<1x32xf32>
    %c40 = arith.constant 40 : index
    %c0_49 = arith.constant 0 : index
    %115 = vector.load %arg1[%c40, %c0_49] : memref<544x128xf32, #tpu.memory_space<vmem>>, vector<32x96xf32>
    %c104 = arith.constant 104 : index
    %c0_50 = arith.constant 0 : index
    %116 = vector.load %arg1[%c104, %c0_50] : memref<544x128xf32, #tpu.memory_space<vmem>>, vector<32x32xf32>
    %c168 = arith.constant 168 : index
    %c0_51 = arith.constant 0 : index
    %117 = vector.load %arg1[%c168, %c0_51] : memref<544x128xf32, #tpu.memory_space<vmem>>, vector<32x64xf32>
    %c264 = arith.constant 264 : index
    %c0_52 = arith.constant 0 : index
    %118 = vector.load %arg1[%c264, %c0_52] : memref<544x128xf32, #tpu.memory_space<vmem>>, vector<64x32xf32>
    %cst_53 = arith.constant dense<0.000000e+00> : vector<16x96xf32>
    %119 = tpu.matmul %106, %115, %cst_53 {dimension_numbers = #tpu.dot_dimension_numbers<[1], [0], [0], [1], [0, 0, 1, 1], [], []>} : vector<16x32xf32>, vector<32x96xf32>, vector<16x96xf32> -> vector<16x96xf32>
    %120 = vector.broadcast %107 : vector<1x96xf32> to vector<16x96xf32>
    %121 = arith.addf %119, %120 : vector<16x96xf32>
    %122 = vector.extract_strided_slice %121 {offsets = [0, 0], sizes = [16, 32], strides = [1, 1]} : vector<16x96xf32> to vector<16x32xf32>
    %123 = vector.extract_strided_slice %121 {offsets = [0, 32], sizes = [16, 32], strides = [1, 1]} : vector<16x96xf32> to vector<16x32xf32>
    %124 = vector.extract_strided_slice %121 {offsets = [0, 64], sizes = [16, 32], strides = [1, 1]} : vector<16x96xf32> to vector<16x32xf32>
    %125 = tpu.concatenate %123, %123, %123, %123 in 0 : vector<16x32xf32>, vector<16x32xf32>, vector<16x32xf32>, vector<16x32xf32> -> vector<64x32xf32>
    %126 = arith.mulf %125, %0 : vector<64x32xf32>
    %127 = tpu.concatenate %124, %124, %124, %124 in 0 : vector<16x32xf32>, vector<16x32xf32>, vector<16x32xf32>, vector<16x32xf32> -> vector<64x32xf32>
    %128 = arith.mulf %127, %0 : vector<64x32xf32>
    %cst_54 = arith.constant dense<0.000000e+00> : vector<16x64xf32>
    %129 = tpu.matmul %122, %126, %cst_54 {dimension_numbers = #tpu.dot_dimension_numbers<[1], [1], [0], [0], [0, 0, 1, 0], [], []>} : vector<16x32xf32>, vector<64x32xf32>, vector<16x64xf32> -> vector<16x64xf32>
    %130 = arith.subf %129, %6 : vector<16x64xf32>
    %cst_55 = arith.constant dense<0xFF800000> : vector<16xf32>
    %131 = vector.multi_reduction <maximumf>, %130, %cst_55 [1] : vector<16x64xf32> to vector<16xf32>
    %132 = vector.shape_cast %131 : vector<16xf32> to vector<16x1xf32>
    %133 = vector.broadcast %132 : vector<16x1xf32> to vector<16x64xf32>
    %134 = arith.subf %130, %133 : vector<16x64xf32>
    %135 = math.exp %134 : vector<16x64xf32>
    %cst_56 = arith.constant dense<0.000000e+00> : vector<16x64xf32>
    %136 = tpu.matmul %135, %1, %cst_56 {dimension_numbers = #tpu.dot_dimension_numbers<[1], [0], [0], [1], [0, 0, 1, 1], [], []>} : vector<16x64xf32>, vector<64x64xf32>, vector<16x64xf32> -> vector<16x64xf32>
    %137 = arith.addf %136, %4 : vector<16x64xf32>
    %138 = tpu.reciprocal %137 {approx = true} : vector<16x64xf32> -> vector<16x64xf32>
    %139 = arith.mulf %137, %138 : vector<16x64xf32>
    %cst_57 = arith.constant 2.000000e+00 : f32
    %140 = vector.broadcast %cst_57 : f32 to vector<16x64xf32>
    %141 = arith.subf %140, %139 : vector<16x64xf32>
    %142 = arith.mulf %138, %141 : vector<16x64xf32>
    %143 = arith.mulf %135, %142 : vector<16x64xf32>
    %cst_58 = arith.constant dense<0.000000e+00> : vector<16x32xf32>
    %144 = tpu.matmul %143, %128, %cst_58 {dimension_numbers = #tpu.dot_dimension_numbers<[1], [0], [0], [1], [0, 0, 1, 1], [], []>} : vector<16x64xf32>, vector<64x32xf32>, vector<16x32xf32> -> vector<16x32xf32>
    %cst_59 = arith.constant dense<0.000000e+00> : vector<16x32xf32>
    %145 = tpu.matmul %144, %116, %cst_59 {dimension_numbers = #tpu.dot_dimension_numbers<[1], [0], [0], [1], [0, 0, 1, 1], [], []>} : vector<16x32xf32>, vector<32x32xf32>, vector<16x32xf32> -> vector<16x32xf32>
    %146 = vector.broadcast %108 : vector<1x32xf32> to vector<16x32xf32>
    %147 = arith.addf %145, %146 : vector<16x32xf32>
    %148 = arith.addf %106, %147 : vector<16x32xf32>
    %cst_60 = arith.constant dense<0.000000e+00> : vector<16xf32>
    %149 = vector.multi_reduction <add>, %148, %cst_60 [1] : vector<16x32xf32> to vector<16xf32>
    %150 = vector.shape_cast %149 : vector<16xf32> to vector<16x1xf32>
    %cst_61 = arith.constant 3.200000e+01 : f32
    %151 = vector.broadcast %cst_61 : f32 to vector<16x1xf32>
    %152 = arith.divf %150, %151 : vector<16x1xf32>
    %153 = vector.broadcast %152 : vector<16x1xf32> to vector<16x32xf32>
    %154 = arith.subf %148, %153 : vector<16x32xf32>
    %155 = arith.mulf %154, %154 : vector<16x32xf32>
    %cst_62 = arith.constant dense<0.000000e+00> : vector<16xf32>
    %156 = vector.multi_reduction <add>, %155, %cst_62 [1] : vector<16x32xf32> to vector<16xf32>
    %157 = vector.shape_cast %156 : vector<16xf32> to vector<16x1xf32>
    %cst_63 = arith.constant 3.200000e+01 : f32
    %158 = vector.broadcast %cst_63 : f32 to vector<16x1xf32>
    %159 = arith.divf %157, %158 : vector<16x1xf32>
    %160 = vector.broadcast %152 : vector<16x1xf32> to vector<16x32xf32>
    %161 = arith.subf %148, %160 : vector<16x32xf32>
    %cst_64 = arith.constant 9.99999974E-6 : f32
    %162 = vector.broadcast %cst_64 : f32 to vector<16x1xf32>
    %163 = arith.addf %159, %162 : vector<16x1xf32>
    %164 = math.rsqrt %163 : vector<16x1xf32>
    %165 = vector.broadcast %164 : vector<16x1xf32> to vector<16x32xf32>
    %166 = arith.mulf %161, %165 : vector<16x32xf32>
    %167 = vector.broadcast %109 : vector<1x32xf32> to vector<16x32xf32>
    %168 = arith.mulf %166, %167 : vector<16x32xf32>
    %169 = vector.broadcast %110 : vector<1x32xf32> to vector<16x32xf32>
    %170 = arith.addf %168, %169 : vector<16x32xf32>
    %cst_65 = arith.constant dense<0.000000e+00> : vector<16x64xf32>
    %171 = tpu.matmul %170, %117, %cst_65 {dimension_numbers = #tpu.dot_dimension_numbers<[1], [0], [0], [1], [0, 0, 1, 1], [], []>} : vector<16x32xf32>, vector<32x64xf32>, vector<16x64xf32> -> vector<16x64xf32>
    %172 = vector.broadcast %111 : vector<1x64xf32> to vector<16x64xf32>
    %173 = arith.addf %171, %172 : vector<16x64xf32>
    %cst_66 = arith.constant 0.000000e+00 : f32
    %174 = vector.broadcast %cst_66 : f32 to vector<16x64xf32>
    %175 = arith.maximumf %173, %174 : vector<16x64xf32>
    %cst_67 = arith.constant dense<0.000000e+00> : vector<16x32xf32>
    %176 = tpu.matmul %175, %118, %cst_67 {dimension_numbers = #tpu.dot_dimension_numbers<[1], [0], [0], [1], [0, 0, 1, 1], [], []>} : vector<16x64xf32>, vector<64x32xf32>, vector<16x32xf32> -> vector<16x32xf32>
    %177 = vector.broadcast %112 : vector<1x32xf32> to vector<16x32xf32>
    %178 = arith.addf %176, %177 : vector<16x32xf32>
    %179 = arith.addf %170, %178 : vector<16x32xf32>
    %cst_68 = arith.constant dense<0.000000e+00> : vector<16xf32>
    %180 = vector.multi_reduction <add>, %179, %cst_68 [1] : vector<16x32xf32> to vector<16xf32>
    %181 = vector.shape_cast %180 : vector<16xf32> to vector<16x1xf32>
    %cst_69 = arith.constant 3.200000e+01 : f32
    %182 = vector.broadcast %cst_69 : f32 to vector<16x1xf32>
    %183 = arith.divf %181, %182 : vector<16x1xf32>
    %184 = vector.broadcast %183 : vector<16x1xf32> to vector<16x32xf32>
    %185 = arith.subf %179, %184 : vector<16x32xf32>
    %186 = arith.mulf %185, %185 : vector<16x32xf32>
    %cst_70 = arith.constant dense<0.000000e+00> : vector<16xf32>
    %187 = vector.multi_reduction <add>, %186, %cst_70 [1] : vector<16x32xf32> to vector<16xf32>
    %188 = vector.shape_cast %187 : vector<16xf32> to vector<16x1xf32>
    %cst_71 = arith.constant 3.200000e+01 : f32
    %189 = vector.broadcast %cst_71 : f32 to vector<16x1xf32>
    %190 = arith.divf %188, %189 : vector<16x1xf32>
    %191 = vector.broadcast %183 : vector<16x1xf32> to vector<16x32xf32>
    %192 = arith.subf %179, %191 : vector<16x32xf32>
    %cst_72 = arith.constant 9.99999974E-6 : f32
    %193 = vector.broadcast %cst_72 : f32 to vector<16x1xf32>
    %194 = arith.addf %190, %193 : vector<16x1xf32>
    %195 = math.rsqrt %194 : vector<16x1xf32>
    %196 = vector.broadcast %195 : vector<16x1xf32> to vector<16x32xf32>
    %197 = arith.mulf %192, %196 : vector<16x32xf32>
    %198 = vector.broadcast %113 : vector<1x32xf32> to vector<16x32xf32>
    %199 = arith.mulf %197, %198 : vector<16x32xf32>
    %200 = vector.broadcast %114 : vector<1x32xf32> to vector<16x32xf32>
    %201 = arith.addf %199, %200 : vector<16x32xf32>
    %c328 = arith.constant 328 : index
    %c0_73 = arith.constant 0 : index
    %202 = vector.load %arg1[%c328, %c0_73] : memref<544x128xf32, #tpu.memory_space<vmem>>, vector<32x128xf32>
    %c392 = arith.constant 392 : index
    %c0_74 = arith.constant 0 : index
    %203 = vector.load %arg1[%c392, %c0_74] : memref<544x128xf32, #tpu.memory_space<vmem>>, vector<1x128xf32>
    %cst_75 = arith.constant dense<0.000000e+00> : vector<16x128xf32>
    %204 = tpu.matmul %201, %202, %cst_75 {dimension_numbers = #tpu.dot_dimension_numbers<[1], [0], [0], [1], [0, 0, 1, 1], [], []>} : vector<16x32xf32>, vector<32x128xf32>, vector<16x128xf32> -> vector<16x128xf32>
    %205 = vector.broadcast %203 : vector<1x128xf32> to vector<16x128xf32>
    %206 = arith.addf %204, %205 : vector<16x128xf32>
    %c0_76 = arith.constant 0 : index
    %c0_77 = arith.constant 0 : index
    %207 = vector.load %arg2[%c0_76, %c0_77] : memref<16x128xf32, #tpu.memory_space<vmem>>, vector<16x128xf32>
    tpu.vector_store %arg2[%c0_76, %c0_77], %206 {strides = array<i32>} : memref<16x128xf32, #tpu.memory_space<vmem>>, vector<16x128xf32>,
    return
  }
}

</mosaic_0001>

<llo_original>
// kernel: tpu_custom_call.1
$region0: #{tpu_custom_call.1}
  #allocation0 [shape = 'u32[]', space=smem, size = 0x4, offset = 0x4, fixed_abs, tag = 'smem constant byte address 0x4 - core index']
  #allocation1 [shape = 'u32[144,128]{1,0:T(1,128)}', space=vmem, size = 0x12000, scoped, tag = 'internal scratch']
  %s0 = inlined_call_operand.vmem [shape: f32[16,4], index: 0, kind: input, shape index: {}]
  %s1 = inlined_call_operand.hbm [shape: f32[544,128], index: 1, kind: input, shape index: {}]
  %s2 = inlined_call_operand.hbm [shape: f32[16,128], index: 2, kind: output, shape index: {}]
  %s3 = sld [smem:[#allocation0]]
  $region22: #{tpu_custom_call.1} parent=0
    _
  %s5 = ssub.s32 1, %s3
  %s6 = scalar_select 0, %s5, %s3
  $region1: #{tpu_custom_call.1} parent=0
    #allocation2 [shape = 'u8[278528]{0}', space=vmem, size = 0x44000, scoped, tag = 'input window, operand 1, single buffered']
    #allocation3 [shape = 's32[1]{0}', space=sflag, size = 0x4, scoped, tag = 'scoped memory for tpu_custom_call.1']
    #allocation4 [shape = 's32[1]{0}', space=sflag, size = 0x4, scoped, tag = 'scoped memory for tpu_custom_call.1']
    #allocation5 [shape = 'u8[8192]{0}', space=vmem, size = 0x2000, scoped, tag = 'output window, operand 0, single buffered']
    %7 = vsyncpa [#allocation3], 0
    %8 = vsyncpa [#allocation4], 0
    // Predicated region
    $region2: #{tpu_custom_call.1} parent=1 // pred_check
      _
    $region3: #{tpu_custom_call.1} parent=1 // pred_check_branch
      %10 = sbr.rel (0) target = $region5
    $region4: #{tpu_custom_call.1} parent=1 // pred_region
      _
    $region5: #{tpu_custom_call.1} parent=1 // pred_fallthru
      _
    // Predicated region
    $region6: #{tpu_custom_call.1} parent=1 // pred_check
      _
    $region7: #{tpu_custom_call.1} parent=1 // pred_check_branch
      %12 = sbr.rel (0) target = $region9
    $region8: #{tpu_custom_call.1} parent=1 // pred_region
      %s14 = ssub.s32 8704, 8704
      %15 = vsyncadd [#allocation3], %s14
      %s16 = sshll.u32 [#allocation2], 4
      %s17 = int_to_ptr.vmem [resolvable:$true] %s16
      %22 = dma.hbm_to_vmem [thread:$0]  %s1, 8704, %s17, [#allocation3], 128, 128, 8
    $region9: #{tpu_custom_call.1} parent=1 // pred_fallthru
      _
    // Predicated region
    $region10: #{tpu_custom_call.1} parent=1 // pred_check
      _
    $region11: #{tpu_custom_call.1} parent=1 // pred_check_branch
      %24 = sbr.rel (0) target = $region13
    $region12: #{tpu_custom_call.1} parent=1 // pred_region
      %25 = dma.done [#allocation3], 8704
    $region13: #{tpu_custom_call.1} parent=1 // pred_fallthru
      _
    %v26 = vld [vmem:[#allocation2 + $0x190] sm:$0xff]
    %v27 = vld [vmem:[#allocation2 + $0x198] sm:$0xff]
    %v28 = vld [vmem:[#allocation2 + $0x1a0] sm:$0xff]
    %v29 = vld [vmem:[#allocation2 + $0x1a8] sm:$0xff]
    %v30 = vld [vmem:[#allocation2 + $0x1b0] sm:$0xff]
    %v31 = vld [vmem:[#allocation2 + $0x1b8] sm:$0xff]
    %v32 = vld [vmem:[#allocation2 + $0x1c0] sm:$0xff]
    %v33 = vld [vmem:[#allocation2 + $0x1c8] sm:$0xff]
    %v34 = vld [vmem:[#allocation2 + $0x1d0] sm:$0xff]
    %v35 = vld [vmem:[#allocation2 + $0x1d8] sm:$0xff]
    %v36 = vld [vmem:[#allocation2 + $0x1e0] sm:$0xff]
    %v37 = vld [vmem:[#allocation2 + $0x1e8] sm:$0xff]
    %v38 = vld [vmem:[#allocation2 + $0x1f0] sm:$0xff]
    %v39 = vld [vmem:[#allocation2 + $0x1f8] sm:$0xff]
    %v40 = vld [vmem:[#allocation2 + $0x200] sm:$0xff]
    %v41 = vld [vmem:[#allocation2 + $0x208] sm:$0xff]
    %v42 = vld [vmem:[#allocation2 + $0x210] sm:$0xff]
    %v43 = vld [vmem:[#allocation2 + $0x218] sm:$0xff]
    %v44 = vsub.f32 1.0, %v42
    %v45 = vsub.f32 1.0, %v43
    %v46 = vmul.f32 %v44, 1e+30
    %v47 = vmul.f32 %v45, 1e+30
    %v48 = vld [vmem:[#allocation2] sm:$0xf]
    %v49 = vld [vmem:[#allocation2 + $0x168] sm:$0xff]
    %v50 = vld [vmem:[#allocation2 + $0x170] sm:$0xff]
    %v51 = vld [vmem:[%s0] sm:$0xff]
    %v52 = vld [vmem:[%s0 + $0x8] sm:$0xff]
    %vm53 = vcmask 31744
    %v55 = vsel %vm53, %v51, 0
    %v58 = vsel %vm53, %v52, 0
    %vm60 = vcmask 1043456
    %v62 = vsel %vm60, %v48, 0
    %64 = vmatprep.subr.mxu0 0.0
    %65 = vmatpush1.msra.mxu0 0.0
    %66 = vmatprep.subr.mxu0 0.0
    %67 = vmatpush1.msra.mxu0 0.0
    %68 = vmatprep.subr.mxu0 0.0
    %69 = vmatpush1.msra.mxu0 0.0
    %70 = vmatprep.subr.mxu0 0.0
    %71 = vmatpush1.msra.mxu0 0.0
    %72 = vmatprep.subr.mxu0 0.0
    %73 = vmatpush1.msra.mxu0 0.0
    %74 = vmatprep.subr.mxu0 0.0
    %75 = vmatpush1.msra.mxu0 0.0
    %76 = vmatprep.subr.mxu0 0.0
    %77 = vmatpush1.msra.mxu0 0.0
    %78 = vmatprep.subr.mxu0 0.0
    %79 = vmatpush1.msra.mxu0 0.0
    %80 = vmatprep.subr.mxu0 0.0
    %81 = vmatpush1.msra.mxu0 0.0
    %82 = vmatprep.subr.mxu0 0.0
    %83 = vmatpush1.msra.mxu0 0.0
    %84 = vmatprep.subr.mxu0 0.0
    %85 = vmatpush1.msra.mxu0 0.0
    %86 = vmatprep.subr.mxu0 0.0
    %87 = vmatpush1.msra.mxu0 0.0
    %88 = vmatprep.subr.mxu0 0.0
    %89 = vmatpush1.msra.mxu0 0.0
    %90 = vmatprep.subr.mxu0 0.0
    %91 = vmatpush1.msra.mxu0 0.0
    %92 = vmatprep.subr.mxu0 0.0
    %93 = vmatpush1.msra.mxu0 0.0
    %94 = vmatprep.subr.mxu0 0.0
    %95 = vmatpush1.msra.mxu0 %v62
    %96 = vmatprep.subr.mxu0 0.0
    %97 = vmatpush2.msra.mxu0 0.0
    %98 = vmatprep.subr.mxu0 0.0
    %99 = vmatpush2.msra.mxu0 0.0
    %100 = vmatprep.subr.mxu0 0.0
    %101 = vmatpush2.msra.mxu0 0.0
    %102 = vmatprep.subr.mxu0 0.0
    %103 = vmatpush2.msra.mxu0 0.0
    %104 = vmatprep.subr.mxu0 0.0
    %105 = vmatpush2.msra.mxu0 0.0
    %106 = vmatprep.subr.mxu0 0.0
    %107 = vmatpush2.msra.mxu0 0.0
    %108 = vmatprep.subr.mxu0 0.0
    %109 = vmatpush2.msra.mxu0 0.0
    %110 = vmatprep.subr.mxu0 0.0
    %111 = vmatpush2.msra.mxu0 0.0
    %112 = vmatprep.subr.mxu0 0.0
    %113 = vmatpush2.msra.mxu0 0.0
    %114 = vmatprep.subr.mxu0 0.0
    %115 = vmatpush2.msra.mxu0 0.0
    %116 = vmatprep.subr.mxu0 0.0
    %117 = vmatpush2.msra.mxu0 0.0
    %118 = vmatprep.subr.mxu0 0.0
    %119 = vmatpush2.msra.mxu0 0.0
    %120 = vmatprep.subr.mxu0 0.0
    %121 = vmatpush2.msra.mxu0 0.0
    %122 = vmatprep.subr.mxu0 0.0
    %123 = vmatpush2.msra.mxu0 0.0
    %124 = vmatprep.subr.mxu0 0.0
    %125 = vmatpush2.msra.mxu0 0.0
    %126 = vmatprep.subr.mxu0 0.0
    %127 = vmatpush2.msra.mxu0 0.0
    %128 = vmatprep.mubr.f32.mxu0 0.0
    %129 = vmatmul.mubr.f32.gmra.mxu0 %v55
    %v130 = vpop.f32.mrf.mxu0
    %v131 = vadd.f32 %v49, %v130
    %v132 = vpop.f32.mrf.mxu0
    %133 = vmatprep.mubr.f32.mxu0 0.0
    %134 = vmatmul.mubr.f32.gmra.mxu0 %v58
    %v135 = vpop.f32.mrf.mxu0
    %v136 = vadd.f32 %v50, %v135
    %v137 = vpop.f32.mrf.mxu0
    %138 = vdwg.mxu0
    %v139 = vld [vmem:[#allocation2 + $0x178] sm:$0x1]
    %v140 = vld [vmem:[#allocation2 + $0x179] sm:$0x1]
    %v141 = vld [vmem:[#allocation2 + $0x17a] sm:$0x1]
    %v142 = vld [vmem:[#allocation2 + $0x17b] sm:$0x1]
    %v143 = vld [vmem:[#allocation2 + $0x17c] sm:$0x1]
    %v144 = vld [vmem:[#allocation2 + $0x17d] sm:$0x1]
    %v145 = vld [vmem:[#allocation2 + $0x17e] sm:$0x1]
    %v146 = vld [vmem:[#allocation2 + $0x17f] sm:$0x1]
    %v147 = vld [vmem:[#allocation2 + $0x8] sm:$0xff]
    %v148 = vld [vmem:[#allocation2 + $0x10] sm:$0xff]
    %v149 = vld [vmem:[#allocation2 + $0x18] sm:$0xff]
    %v150 = vld [vmem:[#allocation2 + $0x20] sm:$0xff]
    %v151 = vld [vmem:[#allocation2 + $0x48] sm:$0xff]
    %v152 = vld [vmem:[#allocation2 + $0x50] sm:$0xff]
    %v153 = vld [vmem:[#allocation2 + $0x58] sm:$0xff]
    %v154 = vld [vmem:[#allocation2 + $0x60] sm:$0xff]
    %v155 = vld [vmem:[#allocation2 + $0x88] sm:$0xff]
    %v156 = vld [vmem:[#allocation2 + $0x90] sm:$0xff]
    %v157 = vld [vmem:[#allocation2 + $0x98] sm:$0xff]
    %v158 = vld [vmem:[#allocation2 + $0xa0] sm:$0xff]
    %v159 = vld [vmem:[#allocation2 + $0xc8] sm:$0xff]
    %v160 = vld [vmem:[#allocation2 + $0xd0] sm:$0xff]
    %v161 = vld [vmem:[#allocation2 + $0xd8] sm:$0xff]
    %v162 = vld [vmem:[#allocation2 + $0xe0] sm:$0xff]
    %v163 = vld [vmem:[#allocation2 + $0xe8] sm:$0xff]
    %v164 = vld [vmem:[#allocation2 + $0xf0] sm:$0xff]
    %v165 = vld [vmem:[#allocation2 + $0xf8] sm:$0xff]
    %v166 = vld [vmem:[#allocation2 + $0x100] sm:$0xff]
    %v167 = vlaneseq
    %v168 = vshrl.u32 %v167, 7
    %v169 = vsub.s32 0, %v168
    %v170 = vrot.slane %v139, %v169
    %vm171 = vcmask 261120
    %v173 = vsel %vm171, %v131, 0
    %v176 = vsel %vm171, %v136, 0
    %178 = vmatprep.subr.mxu0 0.0
    %179 = vmatpush1.msra.mxu0 0.0
    %180 = vmatprep.subr.mxu0 0.0
    %181 = vmatpush1.msra.mxu0 0.0
    %182 = vmatprep.subr.mxu0 0.0
    %183 = vmatpush1.msra.mxu0 0.0
    %184 = vmatprep.subr.mxu0 0.0
    %185 = vmatpush1.msra.mxu0 0.0
    %186 = vmatprep.subr.mxu0 0.0
    %187 = vmatpush1.msra.mxu0 0.0
    %188 = vmatprep.subr.mxu0 0.0
    %189 = vmatpush1.msra.mxu0 0.0
    %190 = vmatprep.subr.mxu0 0.0
    %191 = vmatpush1.msra.mxu0 0.0
    %192 = vmatprep.subr.mxu0 0.0
    %193 = vmatpush1.msra.mxu0 0.0
    %194 = vmatprep.subr.mxu0 0.0
    %195 = vmatpush1.msra.mxu0 0.0
    %196 = vmatprep.subr.mxu0 0.0
    %197 = vmatpush1.msra.mxu0 0.0
    %198 = vmatprep.subr.mxu0 0.0
    %199 = vmatpush1.msra.mxu0 0.0
    %200 = vmatprep.subr.mxu0 0.0
    %201 = vmatpush1.msra.mxu0 0.0
    %202 = vmatprep.subr.mxu0 0.0
    %203 = vmatpush1.msra.mxu0 %v150
    %204 = vmatprep.subr.mxu0 0.0
    %205 = vmatpush1.msra.mxu0 %v149
    %206 = vmatprep.subr.mxu0 0.0
    %207 = vmatpush1.msra.mxu0 %v148
    %208 = vmatprep.subr.mxu0 0.0
    %209 = vmatpush1.msra.mxu0 %v147
    %210 = vmatprep.subr.mxu0 0.0
    %211 = vmatpush2.msra.mxu0 0.0
    %212 = vmatprep.subr.mxu0 0.0
    %213 = vmatpush2.msra.mxu0 0.0
    %214 = vmatprep.subr.mxu0 0.0
    %215 = vmatpush2.msra.mxu0 0.0
    %216 = vmatprep.subr.mxu0 0.0
    %217 = vmatpush2.msra.mxu0 0.0
    %218 = vmatprep.subr.mxu0 0.0
    %219 = vmatpush2.msra.mxu0 0.0
    %220 = vmatprep.subr.mxu0 0.0
    %221 = vmatpush2.msra.mxu0 0.0
    %222 = vmatprep.subr.mxu0 0.0
    %223 = vmatpush2.msra.mxu0 0.0
    %224 = vmatprep.subr.mxu0 0.0
    %225 = vmatpush2.msra.mxu0 0.0
    %226 = vmatprep.subr.mxu0 0.0
    %227 = vmatpush2.msra.mxu0 0.0
    %228 = vmatprep.subr.mxu0 0.0
    %229 = vmatpush2.msra.mxu0 0.0
    %230 = vmatprep.subr.mxu0 0.0
    %231 = vmatpush2.msra.mxu0 0.0
    %232 = vmatprep.subr.mxu0 0.0
    %233 = vmatpush2.msra.mxu0 0.0
    %234 = vmatprep.subr.mxu0 0.0
    %235 = vmatpush2.msra.mxu0 0.0
    %236 = vmatprep.subr.mxu0 0.0
    %237 = vmatpush2.msra.mxu0 0.0
    %238 = vmatprep.subr.mxu0 0.0
    %239 = vmatpush2.msra.mxu0 0.0
    %240 = vmatprep.subr.mxu0 0.0
    %241 = vmatpush2.msra.mxu0 0.0
    %242 = vmatprep.mubr.f32.mxu0 0.0
    %243 = vmatmul.mubr.f32.gmra.mxu0 %v173
    %v244 = vpop.f32.mrf.mxu0
    %v245 = vadd.f32 %v170, %v244
    %v246 = vpop.f32.mrf.mxu0
    %247 = vmatprep.mubr.f32.mxu0 0.0
    %248 = vmatmul.mubr.f32.gmra.mxu0 %v176
    %v249 = vpop.f32.mrf.mxu0
    %v250 = vadd.f32 %v170, %v249
    %v251 = vpop.f32.mrf.mxu0
    %252 = vdwg.mxu0
    %261 = vrot.lane.b32.xlu0 %v26, 32
    %v262 = vpop.permute.xlu0 %261
    %263 = vrot.lane.b32.xlu0 %v27, 32
    %v264 = vpop.permute.xlu0 %263
    %265 = vrot.lane.b32.xlu0 %v28, 32
    %v266 = vpop.permute.xlu0 %265
    %267 = vrot.lane.b32.xlu0 %v29, 32
    %v268 = vpop.permute.xlu0 %267
    %269 = vrot.lane.b32.xlu0 %v30, 32
    %v270 = vpop.permute.xlu0 %269
    %271 = vrot.lane.b32.xlu0 %v31, 32
    %v272 = vpop.permute.xlu0 %271
    %273 = vrot.lane.b32.xlu0 %v32, 32
    %v274 = vpop.permute.xlu0 %273
    %275 = vrot.lane.b32.xlu0 %v33, 32
    %v276 = vpop.permute.xlu0 %275
    %v285 = vmul.f32 %v245, %v262
    %v286 = vmul.f32 %v250, %v264
    %v287 = vmul.f32 %v245, %v266
    %v288 = vmul.f32 %v250, %v268
    %v289 = vmul.f32 %v245, %v270
    %v290 = vmul.f32 %v250, %v272
    %v291 = vmul.f32 %v245, %v274
    %v292 = vmul.f32 %v250, %v276
    %293 = vrot.lane.b32.xlu0 %v26, 64
    %v294 = vpop.permute.xlu0 %293
    %295 = vrot.lane.b32.xlu0 %v27, 64
    %v296 = vpop.permute.xlu0 %295
    %297 = vrot.lane.b32.xlu0 %v28, 64
    %v298 = vpop.permute.xlu0 %297
    %299 = vrot.lane.b32.xlu0 %v29, 64
    %v300 = vpop.permute.xlu0 %299
    %301 = vrot.lane.b32.xlu0 %v30, 64
    %v302 = vpop.permute.xlu0 %301
    %303 = vrot.lane.b32.xlu0 %v31, 64
    %v304 = vpop.permute.xlu0 %303
    %305 = vrot.lane.b32.xlu0 %v32, 64
    %v306 = vpop.permute.xlu0 %305
    %307 = vrot.lane.b32.xlu0 %v33, 64
    %v308 = vpop.permute.xlu0 %307
    %v317 = vmul.f32 %v245, %v294
    %v318 = vmul.f32 %v250, %v296
    %v319 = vmul.f32 %v245, %v298
    %v320 = vmul.f32 %v250, %v300
    %v321 = vmul.f32 %v245, %v302
    %v322 = vmul.f32 %v250, %v304
    %v323 = vmul.f32 %v245, %v306
    %v324 = vmul.f32 %v250, %v308
    %333 = vrot.lane.b32.xlu0 %v285, 96
    %v334 = vpop.permute.xlu0 %333
    %335 = vrot.lane.b32.xlu0 %v286, 96
    %v336 = vpop.permute.xlu0 %335
    %337 = vrot.lane.b32.xlu0 %v287, 96
    %v338 = vpop.permute.xlu0 %337
    %339 = vrot.lane.b32.xlu0 %v288, 96
    %v340 = vpop.permute.xlu0 %339
    %341 = vrot.lane.b32.xlu0 %v289, 96
    %v342 = vpop.permute.xlu0 %341
    %343 = vrot.lane.b32.xlu0 %v290, 96
    %v344 = vpop.permute.xlu0 %343
    %345 = vrot.lane.b32.xlu0 %v291, 96
    %v346 = vpop.permute.xlu0 %345
    %347 = vrot.lane.b32.xlu0 %v292, 96
    %v348 = vpop.permute.xlu0 %347
    %v350 = vsel %vm171, %v245, 0
    %v353 = vsel %vm171, %v250, 0
    %v355 = vsel %vm171, %v334, 0
    %v357 = vsel %vm171, %v336, 0
    %v359 = vsel %vm171, %v338, 0
    %v361 = vsel %vm171, %v340, 0
    %v363 = vsel %vm171, %v342, 0
    %v365 = vsel %vm171, %v344, 0
    %v367 = vsel %vm171, %v346, 0
    %v369 = vsel %vm171, %v348, 0
    %371 = vmatprep.subr.mxu0 0.0
    %372 = vmatpush1.xpose.msra.mxu0 0.0
    %373 = vmatprep.subr.mxu0 0.0
    %374 = vmatpush1.xpose.msra.mxu0 0.0
    %375 = vmatprep.subr.mxu0 0.0
    %376 = vmatpush1.xpose.msra.mxu0 0.0
    %377 = vmatprep.subr.mxu0 0.0
    %378 = vmatpush1.xpose.msra.mxu0 0.0
    %379 = vmatprep.subr.mxu0 0.0
    %380 = vmatpush1.xpose.msra.mxu0 0.0
    %381 = vmatprep.subr.mxu0 0.0
    %382 = vmatpush1.xpose.msra.mxu0 0.0
    %383 = vmatprep.subr.mxu0 0.0
    %384 = vmatpush1.xpose.msra.mxu0 0.0
    %385 = vmatprep.subr.mxu0 0.0
    %386 = vmatpush1.xpose.msra.mxu0 0.0
    %387 = vmatprep.subr.mxu0 0.0
    %388 = vmatpush1.xpose.msra.mxu0 %v369
    %389 = vmatprep.subr.mxu0 0.0
    %390 = vmatpush1.xpose.msra.mxu0 %v367
    %391 = vmatprep.subr.mxu0 0.0
    %392 = vmatpush1.xpose.msra.mxu0 %v365
    %393 = vmatprep.subr.mxu0 0.0
    %394 = vmatpush1.xpose.msra.mxu0 %v363
    %395 = vmatprep.subr.mxu0 0.0
    %396 = vmatpush1.xpose.msra.mxu0 %v361
    %397 = vmatprep.subr.mxu0 0.0
    %398 = vmatpush1.xpose.msra.mxu0 %v359
    %399 = vmatprep.subr.mxu0 0.0
    %400 = vmatpush1.xpose.msra.mxu0 %v357
    %401 = vmatprep.subr.mxu0 0.0
    %402 = vmatpush1.xpose.msra.mxu0 %v355
    %403 = vmatprep.subr.mxu0 0.0
    %404 = vmatpush2.xpose.msra.mxu0 0.0
    %405 = vmatprep.subr.mxu0 0.0
    %406 = vmatpush2.xpose.msra.mxu0 0.0
    %407 = vmatprep.subr.mxu0 0.0
    %408 = vmatpush2.xpose.msra.mxu0 0.0
    %409 = vmatprep.subr.mxu0 0.0
    %410 = vmatpush2.xpose.msra.mxu0 0.0
    %411 = vmatprep.subr.mxu0 0.0
    %412 = vmatpush2.xpose.msra.mxu0 0.0
    %413 = vmatprep.subr.mxu0 0.0
    %414 = vmatpush2.xpose.msra.mxu0 0.0
    %415 = vmatprep.subr.mxu0 0.0
    %416 = vmatpush2.xpose.msra.mxu0 0.0
    %417 = vmatprep.subr.mxu0 0.0
    %418 = vmatpush2.xpose.msra.mxu0 0.0
    %419 = vmatprep.subr.mxu0 0.0
    %420 = vmatpush2.xpose.msra.mxu0 0.0
    %421 = vmatprep.subr.mxu0 0.0
    %422 = vmatpush2.xpose.msra.mxu0 0.0
    %423 = vmatprep.subr.mxu0 0.0
    %424 = vmatpush2.xpose.msra.mxu0 0.0
    %425 = vmatprep.subr.mxu0 0.0
    %426 = vmatpush2.xpose.msra.mxu0 0.0
    %427 = vmatprep.subr.mxu0 0.0
    %428 = vmatpush2.xpose.msra.mxu0 0.0
    %429 = vmatprep.subr.mxu0 0.0
    %430 = vmatpush2.xpose.msra.mxu0 0.0
    %431 = vmatprep.subr.mxu0 0.0
    %432 = vmatpush2.xpose.msra.mxu0 0.0
    %433 = vmatprep.subr.mxu0 0.0
    %434 = vmatpush2.xpose.msra.mxu0 0.0
    %435 = vmatprep.mubr.f32.mxu0 0.0
    %436 = vmatmul.mubr.f32.gmra.mxu0 %v350
    %v437 = vpop.f32.mrf.mxu0
    %v438 = vadd.f32 0.0, %v437
    %v439 = vpop.f32.mrf.mxu0
    %440 = vmatprep.mubr.f32.mxu0 0.0
    %441 = vmatmul.mubr.f32.gmra.mxu0 %v353
    %v442 = vpop.f32.mrf.mxu0
    %v443 = vadd.f32 0.0, %v442
    %v444 = vpop.f32.mrf.mxu0
    %445 = vdwg.mxu0
    %v446 = vsub.f32 %v438, %v46
    %v447 = vsub.f32 %v443, %v47
    %vm448 = vcmask 523264
    %v449 = vsel %vm448, %v446, -inf
    %450 = vmax.xlane.f32.xlu0 %v449
    %v451 = vpop.xlane.xlu0 %450
    %v452 = vsel %vm448, %v447, -inf
    %453 = vmax.xlane.f32.xlu0 %v452
    %v454 = vpop.xlane.xlu0 %453
    %v455 = vsub.f32 %v446, %v451
    %v456 = vsub.f32 %v447, %v454
    %v457 = vmul.f32 %v455, 1.442695
    %v458 = vpow.pop %v457
    %v459 = vmul.f32 %v456, 1.442695
    %v460 = vpow.pop %v459
    %v462 = vsel %vm448, %v458, 0
    %v465 = vsel %vm448, %v460, 0
    %467 = vmatprep.subr.mxu0 0.0
    %468 = vmatpush1.msra.mxu0 0.0
    %469 = vmatprep.subr.mxu0 0.0
    %470 = vmatpush1.msra.mxu0 0.0
    %471 = vmatprep.subr.mxu0 0.0
    %472 = vmatpush1.msra.mxu0 0.0
    %473 = vmatprep.subr.mxu0 0.0
    %474 = vmatpush1.msra.mxu0 0.0
    %475 = vmatprep.subr.mxu0 0.0
    %476 = vmatpush1.msra.mxu0 0.0
    %477 = vmatprep.subr.mxu0 0.0
    %478 = vmatpush1.msra.mxu0 0.0
    %479 = vmatprep.subr.mxu0 0.0
    %480 = vmatpush1.msra.mxu0 0.0
    %481 = vmatprep.subr.mxu0 0.0
    %482 = vmatpush1.msra.mxu0 0.0
    %483 = vmatprep.subr.mxu0 0.0
    %484 = vmatpush1.msra.mxu0 %v41
    %485 = vmatprep.subr.mxu0 0.0
    %486 = vmatpush1.msra.mxu0 %v40
    %487 = vmatprep.subr.mxu0 0.0
    %488 = vmatpush1.msra.mxu0 %v39
    %489 = vmatprep.subr.mxu0 0.0
    %490 = vmatpush1.msra.mxu0 %v38
    %491 = vmatprep.subr.mxu0 0.0
    %492 = vmatpush1.msra.mxu0 %v37
    %493 = vmatprep.subr.mxu0 0.0
    %494 = vmatpush1.msra.mxu0 %v36
    %495 = vmatprep.subr.mxu0 0.0
    %496 = vmatpush1.msra.mxu0 %v35
    %497 = vmatprep.subr.mxu0 0.0
    %498 = vmatpush1.msra.mxu0 %v34
    %499 = vmatprep.subr.mxu0 0.0
    %500 = vmatpush2.msra.mxu0 0.0
    %501 = vmatprep.subr.mxu0 0.0
    %502 = vmatpush2.msra.mxu0 0.0
    %503 = vmatprep.subr.mxu0 0.0
    %504 = vmatpush2.msra.mxu0 0.0
    %505 = vmatprep.subr.mxu0 0.0
    %506 = vmatpush2.msra.mxu0 0.0
    %507 = vmatprep.subr.mxu0 0.0
    %508 = vmatpush2.msra.mxu0 0.0
    %509 = vmatprep.subr.mxu0 0.0
    %510 = vmatpush2.msra.mxu0 0.0
    %511 = vmatprep.subr.mxu0 0.0
    %512 = vmatpush2.msra.mxu0 0.0
    %513 = vmatprep.subr.mxu0 0.0
    %514 = vmatpush2.msra.mxu0 0.0
    %515 = vmatprep.subr.mxu0 0.0
    %516 = vmatpush2.msra.mxu0 0.0
    %517 = vmatprep.subr.mxu0 0.0
    %518 = vmatpush2.msra.mxu0 0.0
    %519 = vmatprep.subr.mxu0 0.0
    %520 = vmatpush2.msra.mxu0 0.0
    %521 = vmatprep.subr.mxu0 0.0
    %522 = vmatpush2.msra.mxu0 0.0
    %523 = vmatprep.subr.mxu0 0.0
    %524 = vmatpush2.msra.mxu0 0.0
    %525 = vmatprep.subr.mxu0 0.0
    %526 = vmatpush2.msra.mxu0 0.0
    %527 = vmatprep.subr.mxu0 0.0
    %528 = vmatpush2.msra.mxu0 0.0
    %529 = vmatprep.subr.mxu0 0.0
    %530 = vmatpush2.msra.mxu0 0.0
    %531 = vmatprep.mubr.f32.mxu0 0.0
    %532 = vmatmul.mubr.f32.gmra.mxu0 %v462
    %v533 = vpop.f32.mrf.mxu0
    %v534 = vadd.f32 %v44, %v533
    %v535 = vpop.f32.mrf.mxu0
    %536 = vmatprep.mubr.f32.mxu0 0.0
    %537 = vmatmul.mubr.f32.gmra.mxu0 %v465
    %v538 = vpop.f32.mrf.mxu0
    %v539 = vadd.f32 %v45, %v538
    %v540 = vpop.f32.mrf.mxu0
    %541 = vdwg.mxu0
    %v542 = vrcp.pop %v534
    %v543 = vrcp.pop %v539
    %v544 = vmul.f32 %v534, %v542
    %v545 = vmul.f32 %v539, %v543
    %v546 = vsub.f32 2.0, %v544
    %v547 = vsub.f32 2.0, %v545
    %v548 = vmul.f32 %v542, %v546
    %v549 = vmul.f32 %v543, %v547
    %v550 = vmul.f32 %v458, %v548
    %v551 = vmul.f32 %v460, %v549
    %560 = vrot.lane.b32.xlu0 %v317, 64
    %v561 = vpop.permute.xlu0 %560
    %562 = vrot.lane.b32.xlu0 %v318, 64
    %v563 = vpop.permute.xlu0 %562
    %564 = vrot.lane.b32.xlu0 %v319, 64
    %v565 = vpop.permute.xlu0 %564
    %566 = vrot.lane.b32.xlu0 %v320, 64
    %v567 = vpop.permute.xlu0 %566
    %568 = vrot.lane.b32.xlu0 %v321, 64
    %v569 = vpop.permute.xlu0 %568
    %570 = vrot.lane.b32.xlu0 %v322, 64
    %v571 = vpop.permute.xlu0 %570
    %572 = vrot.lane.b32.xlu0 %v323, 64
    %v573 = vpop.permute.xlu0 %572
    %574 = vrot.lane.b32.xlu0 %v324, 64
    %v575 = vpop.permute.xlu0 %574
    %v585 = vsel %vm448, %v550, 0
    %v588 = vsel %vm448, %v551, 0
    %590 = vmatprep.subr.mxu0 0.0
    %591 = vmatpush1.msra.mxu0 0.0
    %592 = vmatprep.subr.mxu0 0.0
    %593 = vmatpush1.msra.mxu0 0.0
    %594 = vmatprep.subr.mxu0 0.0
    %595 = vmatpush1.msra.mxu0 0.0
    %596 = vmatprep.subr.mxu0 0.0
    %597 = vmatpush1.msra.mxu0 0.0
    %598 = vmatprep.subr.mxu0 0.0
    %599 = vmatpush1.msra.mxu0 0.0
    %600 = vmatprep.subr.mxu0 0.0
    %601 = vmatpush1.msra.mxu0 0.0
    %602 = vmatprep.subr.mxu0 0.0
    %603 = vmatpush1.msra.mxu0 0.0
    %604 = vmatprep.subr.mxu0 0.0
    %605 = vmatpush1.msra.mxu0 0.0
    %606 = vmatprep.subr.mxu0 0.0
    %607 = vmatpush1.msra.mxu0 %v575
    %608 = vmatprep.subr.mxu0 0.0
    %609 = vmatpush1.msra.mxu0 %v573
    %610 = vmatprep.subr.mxu0 0.0
    %611 = vmatpush1.msra.mxu0 %v571
    %612 = vmatprep.subr.mxu0 0.0
    %613 = vmatpush1.msra.mxu0 %v569
    %614 = vmatprep.subr.mxu0 0.0
    %615 = vmatpush1.msra.mxu0 %v567
    %616 = vmatprep.subr.mxu0 0.0
    %617 = vmatpush1.msra.mxu0 %v565
    %618 = vmatprep.subr.mxu0 0.0
    %619 = vmatpush1.msra.mxu0 %v563
    %620 = vmatprep.subr.mxu0 0.0
    %621 = vmatpush1.msra.mxu0 %v561
    %622 = vmatprep.subr.mxu0 0.0
    %623 = vmatpush2.msra.mxu0 0.0
    %624 = vmatprep.subr.mxu0 0.0
    %625 = vmatpush2.msra.mxu0 0.0
    %626 = vmatprep.subr.mxu0 0.0
    %627 = vmatpush2.msra.mxu0 0.0
    %628 = vmatprep.subr.mxu0 0.0
    %629 = vmatpush2.msra.mxu0 0.0
    %630 = vmatprep.subr.mxu0 0.0
    %631 = vmatpush2.msra.mxu0 0.0
    %632 = vmatprep.subr.mxu0 0.0
    %633 = vmatpush2.msra.mxu0 0.0
    %634 = vmatprep.subr.mxu0 0.0
    %635 = vmatpush2.msra.mxu0 0.0
    %636 = vmatprep.subr.mxu0 0.0
    %637 = vmatpush2.msra.mxu0 0.0
    %638 = vmatprep.subr.mxu0 0.0
    %639 = vmatpush2.msra.mxu0 0.0
    %640 = vmatprep.subr.mxu0 0.0
    %641 = vmatpush2.msra.mxu0 0.0
    %642 = vmatprep.subr.mxu0 0.0
    %643 = vmatpush2.msra.mxu0 0.0
    %644 = vmatprep.subr.mxu0 0.0
    %645 = vmatpush2.msra.mxu0 0.0
    %646 = vmatprep.subr.mxu0 0.0
    %647 = vmatpush2.msra.mxu0 0.0
    %648 = vmatprep.subr.mxu0 0.0
    %649 = vmatpush2.msra.mxu0 0.0
    %650 = vmatprep.subr.mxu0 0.0
    %651 = vmatpush2.msra.mxu0 0.0
    %652 = vmatprep.subr.mxu0 0.0
    %653 = vmatpush2.msra.mxu0 0.0
    %654 = vmatprep.mubr.f32.mxu0 0.0
    %655 = vmatmul.mubr.f32.gmra.mxu0 %v585
    %v656 = vpop.f32.mrf.mxu0
    %v657 = vadd.f32 0.0, %v656
    %v658 = vpop.f32.mrf.mxu0
    %659 = vmatprep.mubr.f32.mxu0 0.0
    %660 = vmatmul.mubr.f32.gmra.mxu0 %v588
    %v661 = vpop.f32.mrf.mxu0
    %v662 = vadd.f32 0.0, %v661
    %v663 = vpop.f32.mrf.mxu0
    %664 = vdwg.mxu0
    %v665 = vlaneseq
    %v666 = vshrl.u32 %v665, 7
    %v667 = vsub.s32 0, %v666
    %v668 = vrot.slane %v140, %v667
    %v670 = vsel %vm171, %v657, 0
    %v673 = vsel %vm171, %v662, 0
    %675 = vmatprep.subr.mxu0 0.0
    %676 = vmatpush1.msra.mxu0 0.0
    %677 = vmatprep.subr.mxu0 0.0
    %678 = vmatpush1.msra.mxu0 0.0
    %679 = vmatprep.subr.mxu0 0.0
    %680 = vmatpush1.msra.mxu0 0.0
    %681 = vmatprep.subr.mxu0 0.0
    %682 = vmatpush1.msra.mxu0 0.0
    %683 = vmatprep.subr.mxu0 0.0
    %684 = vmatpush1.msra.mxu0 0.0
    %685 = vmatprep.subr.mxu0 0.0
    %686 = vmatpush1.msra.mxu0 0.0
    %687 = vmatprep.subr.mxu0 0.0
    %688 = vmatpush1.msra.mxu0 0.0
    %689 = vmatprep.subr.mxu0 0.0
    %690 = vmatpush1.msra.mxu0 0.0
    %691 = vmatprep.subr.mxu0 0.0
    %692 = vmatpush1.msra.mxu0 0.0
    %693 = vmatprep.subr.mxu0 0.0
    %694 = vmatpush1.msra.mxu0 0.0
    %695 = vmatprep.subr.mxu0 0.0
    %696 = vmatpush1.msra.mxu0 0.0
    %697 = vmatprep.subr.mxu0 0.0
    %698 = vmatpush1.msra.mxu0 0.0
    %699 = vmatprep.subr.mxu0 0.0
    %700 = vmatpush1.msra.mxu0 %v154
    %701 = vmatprep.subr.mxu0 0.0
    %702 = vmatpush1.msra.mxu0 %v153
    %703 = vmatprep.subr.mxu0 0.0
    %704 = vmatpush1.msra.mxu0 %v152
    %705 = vmatprep.subr.mxu0 0.0
    %706 = vmatpush1.msra.mxu0 %v151
    %707 = vmatprep.subr.mxu0 0.0
    %708 = vmatpush2.msra.mxu0 0.0
    %709 = vmatprep.subr.mxu0 0.0
    %710 = vmatpush2.msra.mxu0 0.0
    %711 = vmatprep.subr.mxu0 0.0
    %712 = vmatpush2.msra.mxu0 0.0
    %713 = vmatprep.subr.mxu0 0.0
    %714 = vmatpush2.msra.mxu0 0.0
    %715 = vmatprep.subr.mxu0 0.0
    %716 = vmatpush2.msra.mxu0 0.0
    %717 = vmatprep.subr.mxu0 0.0
    %718 = vmatpush2.msra.mxu0 0.0
    %719 = vmatprep.subr.mxu0 0.0
    %720 = vmatpush2.msra.mxu0 0.0
    %721 = vmatprep.subr.mxu0 0.0
    %722 = vmatpush2.msra.mxu0 0.0
    %723 = vmatprep.subr.mxu0 0.0
    %724 = vmatpush2.msra.mxu0 0.0
    %725 = vmatprep.subr.mxu0 0.0
    %726 = vmatpush2.msra.mxu0 0.0
    %727 = vmatprep.subr.mxu0 0.0
    %728 = vmatpush2.msra.mxu0 0.0
    %729 = vmatprep.subr.mxu0 0.0
    %730 = vmatpush2.msra.mxu0 0.0
    %731 = vmatprep.subr.mxu0 0.0
    %732 = vmatpush2.msra.mxu0 0.0
    %733 = vmatprep.subr.mxu0 0.0
    %734 = vmatpush2.msra.mxu0 0.0
    %735 = vmatprep.subr.mxu0 0.0
    %736 = vmatpush2.msra.mxu0 0.0
    %737 = vmatprep.subr.mxu0 0.0
    %738 = vmatpush2.msra.mxu0 0.0
    %739 = vmatprep.mubr.f32.mxu0 0.0
    %740 = vmatmul.mubr.f32.gmra.mxu0 %v670
    %v741 = vpop.f32.mrf.mxu0
    %v742 = vadd.f32 %v668, %v741
    %v743 = vpop.f32.mrf.mxu0
    %744 = vmatprep.mubr.f32.mxu0 0.0
    %745 = vmatmul.mubr.f32.gmra.mxu0 %v673
    %v746 = vpop.f32.mrf.mxu0
    %v747 = vadd.f32 %v668, %v746
    %v748 = vpop.f32.mrf.mxu0
    %749 = vdwg.mxu0
    %v750 = vadd.f32 %v131, %v742
    %v751 = vadd.f32 %v136, %v747
    %v752 = vsel %vm171, %v750, 0.0
    %753 = vadd.xlane.f32.xlu0 %v752
    %v754 = vpop.xlane.xlu0 %753
    %v755 = vsel %vm171, %v751, 0.0
    %756 = vadd.xlane.f32.xlu0 %v755
    %v757 = vpop.xlane.xlu0 %756
    %v758 = vrcp.pop 32.0
    %v759 = vmul.f32 %v754, %v758
    %v760 = vmul.f32 %v757, %v758
    %v761 = vsub.f32 %v750, %v759
    %v762 = vsub.f32 %v751, %v760
    %v763 = vmul.f32 %v761, %v761
    %v764 = vmul.f32 %v762, %v762
    %v765 = vsel %vm171, %v763, 0.0
    %766 = vadd.xlane.f32.xlu0 %v765
    %v767 = vpop.xlane.xlu0 %766
    %v768 = vsel %vm171, %v764, 0.0
    %769 = vadd.xlane.f32.xlu0 %v768
    %v770 = vpop.xlane.xlu0 %769
    %v771 = vmul.f32 %v767, %v758
    %v772 = vmul.f32 %v770, %v758
    %v773 = vadd.f32 %v771, 1e-05
    %v774 = vadd.f32 %v772, 1e-05
    %v775 = vrsqrt.pop %v773
    %v776 = vrsqrt.pop %v774
    %v777 = vmul.f32 %v761, %v775
    %v778 = vmul.f32 %v762, %v776
    %v779 = vlaneseq
    %v780 = vshrl.u32 %v779, 7
    %v781 = vsub.s32 0, %v780
    %v782 = vrot.slane %v141, %v781
    %v783 = vmul.f32 %v777, %v782
    %v784 = vmul.f32 %v778, %v782
    %v785 = vlaneseq
    %v786 = vshrl.u32 %v785, 7
    %v787 = vsub.s32 0, %v786
    %v788 = vrot.slane %v142, %v787
    %v789 = vadd.f32 %v783, %v788
    %v790 = vadd.f32 %v784, %v788
    %v791 = vlaneseq
    %v792 = vshrl.u32 %v791, 7
    %v793 = vsub.s32 0, %v792
    %v794 = vrot.slane %v143, %v793
    %v796 = vsel %vm171, %v789, 0
    %v799 = vsel %vm171, %v790, 0
    %801 = vmatprep.subr.mxu0 0.0
    %802 = vmatpush1.msra.mxu0 0.0
    %803 = vmatprep.subr.mxu0 0.0
    %804 = vmatpush1.msra.mxu0 0.0
    %805 = vmatprep.subr.mxu0 0.0
    %806 = vmatpush1.msra.mxu0 0.0
    %807 = vmatprep.subr.mxu0 0.0
    %808 = vmatpush1.msra.mxu0 0.0
    %809 = vmatprep.subr.mxu0 0.0
    %810 = vmatpush1.msra.mxu0 0.0
    %811 = vmatprep.subr.mxu0 0.0
    %812 = vmatpush1.msra.mxu0 0.0
    %813 = vmatprep.subr.mxu0 0.0
    %814 = vmatpush1.msra.mxu0 0.0
    %815 = vmatprep.subr.mxu0 0.0
    %816 = vmatpush1.msra.mxu0 0.0
    %817 = vmatprep.subr.mxu0 0.0
    %818 = vmatpush1.msra.mxu0 0.0
    %819 = vmatprep.subr.mxu0 0.0
    %820 = vmatpush1.msra.mxu0 0.0
    %821 = vmatprep.subr.mxu0 0.0
    %822 = vmatpush1.msra.mxu0 0.0
    %823 = vmatprep.subr.mxu0 0.0
    %824 = vmatpush1.msra.mxu0 0.0
    %825 = vmatprep.subr.mxu0 0.0
    %826 = vmatpush1.msra.mxu0 %v158
    %827 = vmatprep.subr.mxu0 0.0
    %828 = vmatpush1.msra.mxu0 %v157
    %829 = vmatprep.subr.mxu0 0.0
    %830 = vmatpush1.msra.mxu0 %v156
    %831 = vmatprep.subr.mxu0 0.0
    %832 = vmatpush1.msra.mxu0 %v155
    %833 = vmatprep.subr.mxu0 0.0
    %834 = vmatpush2.msra.mxu0 0.0
    %835 = vmatprep.subr.mxu0 0.0
    %836 = vmatpush2.msra.mxu0 0.0
    %837 = vmatprep.subr.mxu0 0.0
    %838 = vmatpush2.msra.mxu0 0.0
    %839 = vmatprep.subr.mxu0 0.0
    %840 = vmatpush2.msra.mxu0 0.0
    %841 = vmatprep.subr.mxu0 0.0
    %842 = vmatpush2.msra.mxu0 0.0
    %843 = vmatprep.subr.mxu0 0.0
    %844 = vmatpush2.msra.mxu0 0.0
    %845 = vmatprep.subr.mxu0 0.0
    %846 = vmatpush2.msra.mxu0 0.0
    %847 = vmatprep.subr.mxu0 0.0
    %848 = vmatpush2.msra.mxu0 0.0
    %849 = vmatprep.subr.mxu0 0.0
    %850 = vmatpush2.msra.mxu0 0.0
    %851 = vmatprep.subr.mxu0 0.0
    %852 = vmatpush2.msra.mxu0 0.0
    %853 = vmatprep.subr.mxu0 0.0
    %854 = vmatpush2.msra.mxu0 0.0
    %855 = vmatprep.subr.mxu0 0.0
    %856 = vmatpush2.msra.mxu0 0.0
    %857 = vmatprep.subr.mxu0 0.0
    %858 = vmatpush2.msra.mxu0 0.0
    %859 = vmatprep.subr.mxu0 0.0
    %860 = vmatpush2.msra.mxu0 0.0
    %861 = vmatprep.subr.mxu0 0.0
    %862 = vmatpush2.msra.mxu0 0.0
    %863 = vmatprep.subr.mxu0 0.0
    %864 = vmatpush2.msra.mxu0 0.0
    %865 = vmatprep.mubr.f32.mxu0 0.0
    %866 = vmatmul.mubr.f32.gmra.mxu0 %v796
    %v867 = vpop.f32.mrf.mxu0
    %v868 = vadd.f32 %v794, %v867
    %v869 = vpop.f32.mrf.mxu0
    %870 = vmatprep.mubr.f32.mxu0 0.0
    %871 = vmatmul.mubr.f32.gmra.mxu0 %v799
    %v872 = vpop.f32.mrf.mxu0
    %v873 = vadd.f32 %v794, %v872
    %v874 = vpop.f32.mrf.mxu0
    %875 = vdwg.mxu0
    %v876 = vmax.f32 %v868, 0.0
    %v877 = vmax.f32 %v873, 0.0
    %v878 = vlaneseq
    %v879 = vshrl.u32 %v878, 7
    %v880 = vsub.s32 0, %v879
    %v881 = vrot.slane %v144, %v880
    %v883 = vsel %vm448, %v876, 0
    %v886 = vsel %vm448, %v877, 0
    %888 = vmatprep.subr.mxu0 0.0
    %889 = vmatpush1.msra.mxu0 0.0
    %890 = vmatprep.subr.mxu0 0.0
    %891 = vmatpush1.msra.mxu0 0.0
    %892 = vmatprep.subr.mxu0 0.0
    %893 = vmatpush1.msra.mxu0 0.0
    %894 = vmatprep.subr.mxu0 0.0
    %895 = vmatpush1.msra.mxu0 0.0
    %896 = vmatprep.subr.mxu0 0.0
    %897 = vmatpush1.msra.mxu0 0.0
    %898 = vmatprep.subr.mxu0 0.0
    %899 = vmatpush1.msra.mxu0 0.0
    %900 = vmatprep.subr.mxu0 0.0
    %901 = vmatpush1.msra.mxu0 0.0
    %902 = vmatprep.subr.mxu0 0.0
    %903 = vmatpush1.msra.mxu0 0.0
    %904 = vmatprep.subr.mxu0 0.0
    %905 = vmatpush1.msra.mxu0 %v166
    %906 = vmatprep.subr.mxu0 0.0
    %907 = vmatpush1.msra.mxu0 %v165
    %908 = vmatprep.subr.mxu0 0.0
    %909 = vmatpush1.msra.mxu0 %v164
    %910 = vmatprep.subr.mxu0 0.0
    %911 = vmatpush1.msra.mxu0 %v163
    %912 = vmatprep.subr.mxu0 0.0
    %913 = vmatpush1.msra.mxu0 %v162
    %914 = vmatprep.subr.mxu0 0.0
    %915 = vmatpush1.msra.mxu0 %v161
    %916 = vmatprep.subr.mxu0 0.0
    %917 = vmatpush1.msra.mxu0 %v160
    %918 = vmatprep.subr.mxu0 0.0
    %919 = vmatpush1.msra.mxu0 %v159
    %920 = vmatprep.subr.mxu0 0.0
    %921 = vmatpush2.msra.mxu0 0.0
    %922 = vmatprep.subr.mxu0 0.0
    %923 = vmatpush2.msra.mxu0 0.0
    %924 = vmatprep.subr.mxu0 0.0
    %925 = vmatpush2.msra.mxu0 0.0
    %926 = vmatprep.subr.mxu0 0.0
    %927 = vmatpush2.msra.mxu0 0.0
    %928 = vmatprep.subr.mxu0 0.0
    %929 = vmatpush2.msra.mxu0 0.0
    %930 = vmatprep.subr.mxu0 0.0
    %931 = vmatpush2.msra.mxu0 0.0
    %932 = vmatprep.subr.mxu0 0.0
    %933 = vmatpush2.msra.mxu0 0.0
    %934 = vmatprep.subr.mxu0 0.0
    %935 = vmatpush2.msra.mxu0 0.0
    %936 = vmatprep.subr.mxu0 0.0
    %937 = vmatpush2.msra.mxu0 0.0
    %938 = vmatprep.subr.mxu0 0.0
    %939 = vmatpush2.msra.mxu0 0.0
    %940 = vmatprep.subr.mxu0 0.0
    %941 = vmatpush2.msra.mxu0 0.0
    %942 = vmatprep.subr.mxu0 0.0
    %943 = vmatpush2.msra.mxu0 0.0
    %944 = vmatprep.subr.mxu0 0.0
    %945 = vmatpush2.msra.mxu0 0.0
    %946 = vmatprep.subr.mxu0 0.0
    %947 = vmatpush2.msra.mxu0 0.0
    %948 = vmatprep.subr.mxu0 0.0
    %949 = vmatpush2.msra.mxu0 0.0
    %950 = vmatprep.subr.mxu0 0.0
    %951 = vmatpush2.msra.mxu0 0.0
    %952 = vmatprep.mubr.f32.mxu0 0.0
    %953 = vmatmul.mubr.f32.gmra.mxu0 %v883
    %v954 = vpop.f32.mrf.mxu0
    %v955 = vadd.f32 %v881, %v954
    %v956 = vpop.f32.mrf.mxu0
    %957 = vmatprep.mubr.f32.mxu0 0.0
    %958 = vmatmul.mubr.f32.gmra.mxu0 %v886
    %v959 = vpop.f32.mrf.mxu0
    %v960 = vadd.f32 %v881, %v959
    %v961 = vpop.f32.mrf.mxu0
    %962 = vdwg.mxu0
    %v963 = vadd.f32 %v789, %v955
    %v964 = vadd.f32 %v790, %v960
    %v965 = vsel %vm171, %v963, 0.0
    %966 = vadd.xlane.f32.xlu0 %v965
    %v967 = vpop.xlane.xlu0 %966
    %v968 = vsel %vm171, %v964, 0.0
    %969 = vadd.xlane.f32.xlu0 %v968
    %v970 = vpop.xlane.xlu0 %969
    %v971 = vmul.f32 %v967, %v758
    %v972 = vmul.f32 %v970, %v758
    %v973 = vsub.f32 %v963, %v971
    %v974 = vsub.f32 %v964, %v972
    %v975 = vmul.f32 %v973, %v973
    %v976 = vmul.f32 %v974, %v974
    %v977 = vsel %vm171, %v975, 0.0
    %978 = vadd.xlane.f32.xlu0 %v977
    %v979 = vpop.xlane.xlu0 %978
    %v980 = vsel %vm171, %v976, 0.0
    %981 = vadd.xlane.f32.xlu0 %v980
    %v982 = vpop.xlane.xlu0 %981
    %v983 = vmul.f32 %v979, %v758
    %v984 = vmul.f32 %v982, %v758
    %v985 = vadd.f32 %v983, 1e-05
    %v986 = vadd.f32 %v984, 1e-05
    %v987 = vrsqrt.pop %v985
    %v988 = vrsqrt.pop %v986
    %v989 = vmul.f32 %v973, %v987
    %v990 = vmul.f32 %v974, %v988
    %v991 = vlaneseq
    %v992 = vshrl.u32 %v991, 7
    %v993 = vsub.s32 0, %v992
    %v994 = vrot.slane %v145, %v993
    %v995 = vmul.f32 %v989, %v994
    %v996 = vmul.f32 %v990, %v994
    %v997 = vlaneseq
    %v998 = vshrl.u32 %v997, 7
    %v999 = vsub.s32 0, %v998
    %v1000 = vrot.slane %v146, %v999
    %v1001 = vadd.f32 %v995, %v1000
    %v1002 = vadd.f32 %v996, %v1000
    %v1003 = vld [vmem:[#allocation2 + $0x180] sm:$0x1]
    %v1004 = vld [vmem:[#allocation2 + $0x181] sm:$0x1]
    %v1005 = vld [vmem:[#allocation2 + $0x182] sm:$0x1]
    %v1006 = vld [vmem:[#allocation2 + $0x183] sm:$0x1]
    %v1007 = vld [vmem:[#allocation2 + $0x184] sm:$0x1]
    %v1008 = vld [vmem:[#allocation2 + $0x185] sm:$0x1]
    %v1009 = vld [vmem:[#allocation2 + $0x186] sm:$0x1]
    %v1010 = vld [vmem:[#allocation2 + $0x187] sm:$0x1]
    %v1011 = vld [vmem:[#allocation2 + $0x28] sm:$0xff]
    %v1012 = vld [vmem:[#allocation2 + $0x30] sm:$0xff]
    %v1013 = vld [vmem:[#allocation2 + $0x38] sm:$0xff]
    %v1014 = vld [vmem:[#allocation2 + $0x40] sm:$0xff]
    %v1015 = vld [vmem:[#allocation2 + $0x68] sm:$0xff]
    %v1016 = vld [vmem:[#allocation2 + $0x70] sm:$0xff]
    %v1017 = vld [vmem:[#allocation2 + $0x78] sm:$0xff]
    %v1018 = vld [vmem:[#allocation2 + $0x80] sm:$0xff]
    %v1019 = vld [vmem:[#allocation2 + $0xa8] sm:$0xff]
    %v1020 = vld [vmem:[#allocation2 + $0xb0] sm:$0xff]
    %v1021 = vld [vmem:[#allocation2 + $0xb8] sm:$0xff]
    %v1022 = vld [vmem:[#allocation2 + $0xc0] sm:$0xff]
    %v1023 = vld [vmem:[#allocation2 + $0x108] sm:$0xff]
    %v1024 = vld [vmem:[#allocation2 + $0x110] sm:$0xff]
    %v1025 = vld [vmem:[#allocation2 + $0x118] sm:$0xff]
    %v1026 = vld [vmem:[#allocation2 + $0x120] sm:$0xff]
    %v1027 = vld [vmem:[#allocation2 + $0x128] sm:$0xff]
    %v1028 = vld [vmem:[#allocation2 + $0x130] sm:$0xff]
    %v1029 = vld [vmem:[#allocation2 + $0x138] sm:$0xff]
    %v1030 = vld [vmem:[#allocation2 + $0x140] sm:$0xff]
    %v1031 = vlaneseq
    %v1032 = vshrl.u32 %v1031, 7
    %v1033 = vsub.s32 0, %v1032
    %v1034 = vrot.slane %v1003, %v1033
    %v1036 = vsel %vm171, %v1001, 0
    %v1039 = vsel %vm171, %v1002, 0
    %1041 = vmatprep.subr.mxu0 0.0
    %1042 = vmatpush1.msra.mxu0 0.0
    %1043 = vmatprep.subr.mxu0 0.0
    %1044 = vmatpush1.msra.mxu0 0.0
    %1045 = vmatprep.subr.mxu0 0.0
    %1046 = vmatpush1.msra.mxu0 0.0
    %1047 = vmatprep.subr.mxu0 0.0
    %1048 = vmatpush1.msra.mxu0 0.0
    %1049 = vmatprep.subr.mxu0 0.0
    %1050 = vmatpush1.msra.mxu0 0.0
    %1051 = vmatprep.subr.mxu0 0.0
    %1052 = vmatpush1.msra.mxu0 0.0
    %1053 = vmatprep.subr.mxu0 0.0
    %1054 = vmatpush1.msra.mxu0 0.0
    %1055 = vmatprep.subr.mxu0 0.0
    %1056 = vmatpush1.msra.mxu0 0.0
    %1057 = vmatprep.subr.mxu0 0.0
    %1058 = vmatpush1.msra.mxu0 0.0
    %1059 = vmatprep.subr.mxu0 0.0
    %1060 = vmatpush1.msra.mxu0 0.0
    %1061 = vmatprep.subr.mxu0 0.0
    %1062 = vmatpush1.msra.mxu0 0.0
    %1063 = vmatprep.subr.mxu0 0.0
    %1064 = vmatpush1.msra.mxu0 0.0
    %1065 = vmatprep.subr.mxu0 0.0
    %1066 = vmatpush1.msra.mxu0 %v1014
    %1067 = vmatprep.subr.mxu0 0.0
    %1068 = vmatpush1.msra.mxu0 %v1013
    %1069 = vmatprep.subr.mxu0 0.0
    %1070 = vmatpush1.msra.mxu0 %v1012
    %1071 = vmatprep.subr.mxu0 0.0
    %1072 = vmatpush1.msra.mxu0 %v1011
    %1073 = vmatprep.subr.mxu0 0.0
    %1074 = vmatpush2.msra.mxu0 0.0
    %1075 = vmatprep.subr.mxu0 0.0
    %1076 = vmatpush2.msra.mxu0 0.0
    %1077 = vmatprep.subr.mxu0 0.0
    %1078 = vmatpush2.msra.mxu0 0.0
    %1079 = vmatprep.subr.mxu0 0.0
    %1080 = vmatpush2.msra.mxu0 0.0
    %1081 = vmatprep.subr.mxu0 0.0
    %1082 = vmatpush2.msra.mxu0 0.0
    %1083 = vmatprep.subr.mxu0 0.0
    %1084 = vmatpush2.msra.mxu0 0.0
    %1085 = vmatprep.subr.mxu0 0.0
    %1086 = vmatpush2.msra.mxu0 0.0
    %1087 = vmatprep.subr.mxu0 0.0
    %1088 = vmatpush2.msra.mxu0 0.0
    %1089 = vmatprep.subr.mxu0 0.0
    %1090 = vmatpush2.msra.mxu0 0.0
    %1091 = vmatprep.subr.mxu0 0.0
    %1092 = vmatpush2.msra.mxu0 0.0
    %1093 = vmatprep.subr.mxu0 0.0
    %1094 = vmatpush2.msra.mxu0 0.0
    %1095 = vmatprep.subr.mxu0 0.0
    %1096 = vmatpush2.msra.mxu0 0.0
    %1097 = vmatprep.subr.mxu0 0.0
    %1098 = vmatpush2.msra.mxu0 0.0
    %1099 = vmatprep.subr.mxu0 0.0
    %1100 = vmatpush2.msra.mxu0 0.0
    %1101 = vmatprep.subr.mxu0 0.0
    %1102 = vmatpush2.msra.mxu0 0.0
    %1103 = vmatprep.subr.mxu0 0.0
    %1104 = vmatpush2.msra.mxu0 0.0
    %1105 = vmatprep.mubr.f32.mxu0 0.0
    %1106 = vmatmul.mubr.f32.gmra.mxu0 %v1036
    %v1107 = vpop.f32.mrf.mxu0
    %v1108 = vadd.f32 %v1034, %v1107
    %v1109 = vpop.f32.mrf.mxu0
    %1110 = vmatprep.mubr.f32.mxu0 0.0
    %1111 = vmatmul.mubr.f32.gmra.mxu0 %v1039
    %v1112 = vpop.f32.mrf.mxu0
    %v1113 = vadd.f32 %v1034, %v1112
    %v1114 = vpop.f32.mrf.mxu0
    %1115 = vdwg.mxu0
    %v1116 = vmul.f32 %v1108, %v262
    %v1117 = vmul.f32 %v1113, %v264
    %v1118 = vmul.f32 %v1108, %v266
    %v1119 = vmul.f32 %v1113, %v268
    %v1120 = vmul.f32 %v1108, %v270
    %v1121 = vmul.f32 %v1113, %v272
    %v1122 = vmul.f32 %v1108, %v274
    %v1123 = vmul.f32 %v1113, %v276
    %v1124 = vmul.f32 %v1108, %v294
    %v1125 = vmul.f32 %v1113, %v296
    %v1126 = vmul.f32 %v1108, %v298
    %v1127 = vmul.f32 %v1113, %v300
    %v1128 = vmul.f32 %v1108, %v302
    %v1129 = vmul.f32 %v1113, %v304
    %v1130 = vmul.f32 %v1108, %v306
    %v1131 = vmul.f32 %v1113, %v308
    %1140 = vrot.lane.b32.xlu0 %v1116, 96
    %v1141 = vpop.permute.xlu0 %1140
    %1142 = vrot.lane.b32.xlu0 %v1117, 96
    %v1143 = vpop.permute.xlu0 %1142
    %1144 = vrot.lane.b32.xlu0 %v1118, 96
    %v1145 = vpop.permute.xlu0 %1144
    %1146 = vrot.lane.b32.xlu0 %v1119, 96
    %v1147 = vpop.permute.xlu0 %1146
    %1148 = vrot.lane.b32.xlu0 %v1120, 96
    %v1149 = vpop.permute.xlu0 %1148
    %1150 = vrot.lane.b32.xlu0 %v1121, 96
    %v1151 = vpop.permute.xlu0 %1150
    %1152 = vrot.lane.b32.xlu0 %v1122, 96
    %v1153 = vpop.permute.xlu0 %1152
    %1154 = vrot.lane.b32.xlu0 %v1123, 96
    %v1155 = vpop.permute.xlu0 %1154
    %v1157 = vsel %vm171, %v1108, 0
    %v1160 = vsel %vm171, %v1113, 0
    %v1162 = vsel %vm171, %v1141, 0
    %v1164 = vsel %vm171, %v1143, 0
    %v1166 = vsel %vm171, %v1145, 0
    %v1168 = vsel %vm171, %v1147, 0
    %v1170 = vsel %vm171, %v1149, 0
    %v1172 = vsel %vm171, %v1151, 0
    %v1174 = vsel %vm171, %v1153, 0
    %v1176 = vsel %vm171, %v1155, 0
    %1178 = vmatprep.subr.mxu0 0.0
    %1179 = vmatpush1.xpose.msra.mxu0 0.0
    %1180 = vmatprep.subr.mxu0 0.0
    %1181 = vmatpush1.xpose.msra.mxu0 0.0
    %1182 = vmatprep.subr.mxu0 0.0
    %1183 = vmatpush1.xpose.msra.mxu0 0.0
    %1184 = vmatprep.subr.mxu0 0.0
    %1185 = vmatpush1.xpose.msra.mxu0 0.0
    %1186 = vmatprep.subr.mxu0 0.0
    %1187 = vmatpush1.xpose.msra.mxu0 0.0
    %1188 = vmatprep.subr.mxu0 0.0
    %1189 = vmatpush1.xpose.msra.mxu0 0.0
    %1190 = vmatprep.subr.mxu0 0.0
    %1191 = vmatpush1.xpose.msra.mxu0 0.0
    %1192 = vmatprep.subr.mxu0 0.0
    %1193 = vmatpush1.xpose.msra.mxu0 0.0
    %1194 = vmatprep.subr.mxu0 0.0
    %1195 = vmatpush1.xpose.msra.mxu0 %v1176
    %1196 = vmatprep.subr.mxu0 0.0
    %1197 = vmatpush1.xpose.msra.mxu0 %v1174
    %1198 = vmatprep.subr.mxu0 0.0
    %1199 = vmatpush1.xpose.msra.mxu0 %v1172
    %1200 = vmatprep.subr.mxu0 0.0
    %1201 = vmatpush1.xpose.msra.mxu0 %v1170
    %1202 = vmatprep.subr.mxu0 0.0
    %1203 = vmatpush1.xpose.msra.mxu0 %v1168
    %1204 = vmatprep.subr.mxu0 0.0
    %1205 = vmatpush1.xpose.msra.mxu0 %v1166
    %1206 = vmatprep.subr.mxu0 0.0
    %1207 = vmatpush1.xpose.msra.mxu0 %v1164
    %1208 = vmatprep.subr.mxu0 0.0
    %1209 = vmatpush1.xpose.msra.mxu0 %v1162
    %1210 = vmatprep.subr.mxu0 0.0
    %1211 = vmatpush2.xpose.msra.mxu0 0.0
    %1212 = vmatprep.subr.mxu0 0.0
    %1213 = vmatpush2.xpose.msra.mxu0 0.0
    %1214 = vmatprep.subr.mxu0 0.0
    %1215 = vmatpush2.xpose.msra.mxu0 0.0
    %1216 = vmatprep.subr.mxu0 0.0
    %1217 = vmatpush2.xpose.msra.mxu0 0.0
    %1218 = vmatprep.subr.mxu0 0.0
    %1219 = vmatpush2.xpose.msra.mxu0 0.0
    %1220 = vmatprep.subr.mxu0 0.0
    %1221 = vmatpush2.xpose.msra.mxu0 0.0
    %1222 = vmatprep.subr.mxu0 0.0
    %1223 = vmatpush2.xpose.msra.mxu0 0.0
    %1224 = vmatprep.subr.mxu0 0.0
    %1225 = vmatpush2.xpose.msra.mxu0 0.0
    %1226 = vmatprep.subr.mxu0 0.0
    %1227 = vmatpush2.xpose.msra.mxu0 0.0
    %1228 = vmatprep.subr.mxu0 0.0
    %1229 = vmatpush2.xpose.msra.mxu0 0.0
    %1230 = vmatprep.subr.mxu0 0.0
    %1231 = vmatpush2.xpose.msra.mxu0 0.0
    %1232 = vmatprep.subr.mxu0 0.0
    %1233 = vmatpush2.xpose.msra.mxu0 0.0
    %1234 = vmatprep.subr.mxu0 0.0
    %1235 = vmatpush2.xpose.msra.mxu0 0.0
    %1236 = vmatprep.subr.mxu0 0.0
    %1237 = vmatpush2.xpose.msra.mxu0 0.0
    %1238 = vmatprep.subr.mxu0 0.0
    %1239 = vmatpush2.xpose.msra.mxu0 0.0
    %1240 = vmatprep.subr.mxu0 0.0
    %1241 = vmatpush2.xpose.msra.mxu0 0.0
    %1242 = vmatprep.mubr.f32.mxu0 0.0
    %1243 = vmatmul.mubr.f32.gmra.mxu0 %v1157
    %v1244 = vpop.f32.mrf.mxu0
    %v1245 = vadd.f32 0.0, %v1244
    %v1246 = vpop.f32.mrf.mxu0
    %1247 = vmatprep.mubr.f32.mxu0 0.0
    %1248 = vmatmul.mubr.f32.gmra.mxu0 %v1160
    %v1249 = vpop.f32.mrf.mxu0
    %v1250 = vadd.f32 0.0, %v1249
    %v1251 = vpop.f32.mrf.mxu0
    %1252 = vdwg.mxu0
    %v1253 = vsub.f32 %v1245, %v46
    %v1254 = vsub.f32 %v1250, %v47
    %v1255 = vsel %vm448, %v1253, -inf
    %1256 = vmax.xlane.f32.xlu0 %v1255
    %v1257 = vpop.xlane.xlu0 %1256
    %v1258 = vsel %vm448, %v1254, -inf
    %1259 = vmax.xlane.f32.xlu0 %v1258
    %v1260 = vpop.xlane.xlu0 %1259
    %v1261 = vsub.f32 %v1253, %v1257
    %v1262 = vsub.f32 %v1254, %v1260
    %v1263 = vmul.f32 %v1261, 1.442695
    %v1264 = vpow.pop %v1263
    %v1265 = vmul.f32 %v1262, 1.442695
    %v1266 = vpow.pop %v1265
    %v1268 = vsel %vm448, %v1264, 0
    %v1271 = vsel %vm448, %v1266, 0
    %1273 = vmatprep.subr.mxu0 0.0
    %1274 = vmatpush1.msra.mxu0 0.0
    %1275 = vmatprep.subr.mxu0 0.0
    %1276 = vmatpush1.msra.mxu0 0.0
    %1277 = vmatprep.subr.mxu0 0.0
    %1278 = vmatpush1.msra.mxu0 0.0
    %1279 = vmatprep.subr.mxu0 0.0
    %1280 = vmatpush1.msra.mxu0 0.0
    %1281 = vmatprep.subr.mxu0 0.0
    %1282 = vmatpush1.msra.mxu0 0.0
    %1283 = vmatprep.subr.mxu0 0.0
    %1284 = vmatpush1.msra.mxu0 0.0
    %1285 = vmatprep.subr.mxu0 0.0
    %1286 = vmatpush1.msra.mxu0 0.0
    %1287 = vmatprep.subr.mxu0 0.0
    %1288 = vmatpush1.msra.mxu0 0.0
    %1289 = vmatprep.subr.mxu0 0.0
    %1290 = vmatpush1.msra.mxu0 %v41
    %1291 = vmatprep.subr.mxu0 0.0
    %1292 = vmatpush1.msra.mxu0 %v40
    %1293 = vmatprep.subr.mxu0 0.0
    %1294 = vmatpush1.msra.mxu0 %v39
    %1295 = vmatprep.subr.mxu0 0.0
    %1296 = vmatpush1.msra.mxu0 %v38
    %1297 = vmatprep.subr.mxu0 0.0
    %1298 = vmatpush1.msra.mxu0 %v37
    %1299 = vmatprep.subr.mxu0 0.0
    %1300 = vmatpush1.msra.mxu0 %v36
    %1301 = vmatprep.subr.mxu0 0.0
    %1302 = vmatpush1.msra.mxu0 %v35
    %1303 = vmatprep.subr.mxu0 0.0
    %1304 = vmatpush1.msra.mxu0 %v34
    %1305 = vmatprep.subr.mxu0 0.0
    %1306 = vmatpush2.msra.mxu0 0.0
    %1307 = vmatprep.subr.mxu0 0.0
    %1308 = vmatpush2.msra.mxu0 0.0
    %1309 = vmatprep.subr.mxu0 0.0
    %1310 = vmatpush2.msra.mxu0 0.0
    %1311 = vmatprep.subr.mxu0 0.0
    %1312 = vmatpush2.msra.mxu0 0.0
    %1313 = vmatprep.subr.mxu0 0.0
    %1314 = vmatpush2.msra.mxu0 0.0
    %1315 = vmatprep.subr.mxu0 0.0
    %1316 = vmatpush2.msra.mxu0 0.0
    %1317 = vmatprep.subr.mxu0 0.0
    %1318 = vmatpush2.msra.mxu0 0.0
    %1319 = vmatprep.subr.mxu0 0.0
    %1320 = vmatpush2.msra.mxu0 0.0
    %1321 = vmatprep.subr.mxu0 0.0
    %1322 = vmatpush2.msra.mxu0 0.0
    %1323 = vmatprep.subr.mxu0 0.0
    %1324 = vmatpush2.msra.mxu0 0.0
    %1325 = vmatprep.subr.mxu0 0.0
    %1326 = vmatpush2.msra.mxu0 0.0
    %1327 = vmatprep.subr.mxu0 0.0
    %1328 = vmatpush2.msra.mxu0 0.0
    %1329 = vmatprep.subr.mxu0 0.0
    %1330 = vmatpush2.msra.mxu0 0.0
    %1331 = vmatprep.subr.mxu0 0.0
    %1332 = vmatpush2.msra.mxu0 0.0
    %1333 = vmatprep.subr.mxu0 0.0
    %1334 = vmatpush2.msra.mxu0 0.0
    %1335 = vmatprep.subr.mxu0 0.0
    %1336 = vmatpush2.msra.mxu0 0.0
    %1337 = vmatprep.mubr.f32.mxu0 0.0
    %1338 = vmatmul.mubr.f32.gmra.mxu0 %v1268
    %v1339 = vpop.f32.mrf.mxu0
    %v1340 = vadd.f32 %v44, %v1339
    %v1341 = vpop.f32.mrf.mxu0
    %1342 = vmatprep.mubr.f32.mxu0 0.0
    %1343 = vmatmul.mubr.f32.gmra.mxu0 %v1271
    %v1344 = vpop.f32.mrf.mxu0
    %v1345 = vadd.f32 %v45, %v1344
    %v1346 = vpop.f32.mrf.mxu0
    %1347 = vdwg.mxu0
    %v1348 = vrcp.pop %v1340
    %v1349 = vrcp.pop %v1345
    %v1350 = vmul.f32 %v1340, %v1348
    %v1351 = vmul.f32 %v1345, %v1349
    %v1352 = vsub.f32 2.0, %v1350
    %v1353 = vsub.f32 2.0, %v1351
    %v1354 = vmul.f32 %v1348, %v1352
    %v1355 = vmul.f32 %v1349, %v1353
    %v1356 = vmul.f32 %v1264, %v1354
    %v1357 = vmul.f32 %v1266, %v1355
    %1366 = vrot.lane.b32.xlu0 %v1124, 64
    %v1367 = vpop.permute.xlu0 %1366
    %1368 = vrot.lane.b32.xlu0 %v1125, 64
    %v1369 = vpop.permute.xlu0 %1368
    %1370 = vrot.lane.b32.xlu0 %v1126, 64
    %v1371 = vpop.permute.xlu0 %1370
    %1372 = vrot.lane.b32.xlu0 %v1127, 64
    %v1373 = vpop.permute.xlu0 %1372
    %1374 = vrot.lane.b32.xlu0 %v1128, 64
    %v1375 = vpop.permute.xlu0 %1374
    %1376 = vrot.lane.b32.xlu0 %v1129, 64
    %v1377 = vpop.permute.xlu0 %1376
    %1378 = vrot.lane.b32.xlu0 %v1130, 64
    %v1379 = vpop.permute.xlu0 %1378
    %1380 = vrot.lane.b32.xlu0 %v1131, 64
    %v1381 = vpop.permute.xlu0 %1380
    %v1391 = vsel %vm448, %v1356, 0
    %v1394 = vsel %vm448, %v1357, 0
    %1396 = vmatprep.subr.mxu0 0.0
    %1397 = vmatpush1.msra.mxu0 0.0
    %1398 = vmatprep.subr.mxu0 0.0
    %1399 = vmatpush1.msra.mxu0 0.0
    %1400 = vmatprep.subr.mxu0 0.0
    %1401 = vmatpush1.msra.mxu0 0.0
    %1402 = vmatprep.subr.mxu0 0.0
    %1403 = vmatpush1.msra.mxu0 0.0
    %1404 = vmatprep.subr.mxu0 0.0
    %1405 = vmatpush1.msra.mxu0 0.0
    %1406 = vmatprep.subr.mxu0 0.0
    %1407 = vmatpush1.msra.mxu0 0.0
    %1408 = vmatprep.subr.mxu0 0.0
    %1409 = vmatpush1.msra.mxu0 0.0
    %1410 = vmatprep.subr.mxu0 0.0
    %1411 = vmatpush1.msra.mxu0 0.0
    %1412 = vmatprep.subr.mxu0 0.0
    %1413 = vmatpush1.msra.mxu0 %v1381
    %1414 = vmatprep.subr.mxu0 0.0
    %1415 = vmatpush1.msra.mxu0 %v1379
    %1416 = vmatprep.subr.mxu0 0.0
    %1417 = vmatpush1.msra.mxu0 %v1377
    %1418 = vmatprep.subr.mxu0 0.0
    %1419 = vmatpush1.msra.mxu0 %v1375
    %1420 = vmatprep.subr.mxu0 0.0
    %1421 = vmatpush1.msra.mxu0 %v1373
    %1422 = vmatprep.subr.mxu0 0.0
    %1423 = vmatpush1.msra.mxu0 %v1371
    %1424 = vmatprep.subr.mxu0 0.0
    %1425 = vmatpush1.msra.mxu0 %v1369
    %1426 = vmatprep.subr.mxu0 0.0
    %1427 = vmatpush1.msra.mxu0 %v1367
    %1428 = vmatprep.subr.mxu0 0.0
    %1429 = vmatpush2.msra.mxu0 0.0
    %1430 = vmatprep.subr.mxu0 0.0
    %1431 = vmatpush2.msra.mxu0 0.0
    %1432 = vmatprep.subr.mxu0 0.0
    %1433 = vmatpush2.msra.mxu0 0.0
    %1434 = vmatprep.subr.mxu0 0.0
    %1435 = vmatpush2.msra.mxu0 0.0
    %1436 = vmatprep.subr.mxu0 0.0
    %1437 = vmatpush2.msra.mxu0 0.0
    %1438 = vmatprep.subr.mxu0 0.0
    %1439 = vmatpush2.msra.mxu0 0.0
    %1440 = vmatprep.subr.mxu0 0.0
    %1441 = vmatpush2.msra.mxu0 0.0
    %1442 = vmatprep.subr.mxu0 0.0
    %1443 = vmatpush2.msra.mxu0 0.0
    %1444 = vmatprep.subr.mxu0 0.0
    %1445 = vmatpush2.msra.mxu0 0.0
    %1446 = vmatprep.subr.mxu0 0.0
    %1447 = vmatpush2.msra.mxu0 0.0
    %1448 = vmatprep.subr.mxu0 0.0
    %1449 = vmatpush2.msra.mxu0 0.0
    %1450 = vmatprep.subr.mxu0 0.0
    %1451 = vmatpush2.msra.mxu0 0.0
    %1452 = vmatprep.subr.mxu0 0.0
    %1453 = vmatpush2.msra.mxu0 0.0
    %1454 = vmatprep.subr.mxu0 0.0
    %1455 = vmatpush2.msra.mxu0 0.0
    %1456 = vmatprep.subr.mxu0 0.0
    %1457 = vmatpush2.msra.mxu0 0.0
    %1458 = vmatprep.subr.mxu0 0.0
    %1459 = vmatpush2.msra.mxu0 0.0
    %1460 = vmatprep.mubr.f32.mxu0 0.0
    %1461 = vmatmul.mubr.f32.gmra.mxu0 %v1391
    %v1462 = vpop.f32.mrf.mxu0
    %v1463 = vadd.f32 0.0, %v1462
    %v1464 = vpop.f32.mrf.mxu0
    %1465 = vmatprep.mubr.f32.mxu0 0.0
    %1466 = vmatmul.mubr.f32.gmra.mxu0 %v1394
    %v1467 = vpop.f32.mrf.mxu0
    %v1468 = vadd.f32 0.0, %v1467
    %v1469 = vpop.f32.mrf.mxu0
    %1470 = vdwg.mxu0
    %v1471 = vlaneseq
    %v1472 = vshrl.u32 %v1471, 7
    %v1473 = vsub.s32 0, %v1472
    %v1474 = vrot.slane %v1004, %v1473
    %v1476 = vsel %vm171, %v1463, 0
    %v1479 = vsel %vm171, %v1468, 0
    %1481 = vmatprep.subr.mxu0 0.0
    %1482 = vmatpush1.msra.mxu0 0.0
    %1483 = vmatprep.subr.mxu0 0.0
    %1484 = vmatpush1.msra.mxu0 0.0
    %1485 = vmatprep.subr.mxu0 0.0
    %1486 = vmatpush1.msra.mxu0 0.0
    %1487 = vmatprep.subr.mxu0 0.0
    %1488 = vmatpush1.msra.mxu0 0.0
    %1489 = vmatprep.subr.mxu0 0.0
    %1490 = vmatpush1.msra.mxu0 0.0
    %1491 = vmatprep.subr.mxu0 0.0
    %1492 = vmatpush1.msra.mxu0 0.0
    %1493 = vmatprep.subr.mxu0 0.0
    %1494 = vmatpush1.msra.mxu0 0.0
    %1495 = vmatprep.subr.mxu0 0.0
    %1496 = vmatpush1.msra.mxu0 0.0
    %1497 = vmatprep.subr.mxu0 0.0
    %1498 = vmatpush1.msra.mxu0 0.0
    %1499 = vmatprep.subr.mxu0 0.0
    %1500 = vmatpush1.msra.mxu0 0.0
    %1501 = vmatprep.subr.mxu0 0.0
    %1502 = vmatpush1.msra.mxu0 0.0
    %1503 = vmatprep.subr.mxu0 0.0
    %1504 = vmatpush1.msra.mxu0 0.0
    %1505 = vmatprep.subr.mxu0 0.0
    %1506 = vmatpush1.msra.mxu0 %v1018
    %1507 = vmatprep.subr.mxu0 0.0
    %1508 = vmatpush1.msra.mxu0 %v1017
    %1509 = vmatprep.subr.mxu0 0.0
    %1510 = vmatpush1.msra.mxu0 %v1016
    %1511 = vmatprep.subr.mxu0 0.0
    %1512 = vmatpush1.msra.mxu0 %v1015
    %1513 = vmatprep.subr.mxu0 0.0
    %1514 = vmatpush2.msra.mxu0 0.0
    %1515 = vmatprep.subr.mxu0 0.0
    %1516 = vmatpush2.msra.mxu0 0.0
    %1517 = vmatprep.subr.mxu0 0.0
    %1518 = vmatpush2.msra.mxu0 0.0
    %1519 = vmatprep.subr.mxu0 0.0
    %1520 = vmatpush2.msra.mxu0 0.0
    %1521 = vmatprep.subr.mxu0 0.0
    %1522 = vmatpush2.msra.mxu0 0.0
    %1523 = vmatprep.subr.mxu0 0.0
    %1524 = vmatpush2.msra.mxu0 0.0
    %1525 = vmatprep.subr.mxu0 0.0
    %1526 = vmatpush2.msra.mxu0 0.0
    %1527 = vmatprep.subr.mxu0 0.0
    %1528 = vmatpush2.msra.mxu0 0.0
    %1529 = vmatprep.subr.mxu0 0.0
    %1530 = vmatpush2.msra.mxu0 0.0
    %1531 = vmatprep.subr.mxu0 0.0
    %1532 = vmatpush2.msra.mxu0 0.0
    %1533 = vmatprep.subr.mxu0 0.0
    %1534 = vmatpush2.msra.mxu0 0.0
    %1535 = vmatprep.subr.mxu0 0.0
    %1536 = vmatpush2.msra.mxu0 0.0
    %1537 = vmatprep.subr.mxu0 0.0
    %1538 = vmatpush2.msra.mxu0 0.0
    %1539 = vmatprep.subr.mxu0 0.0
    %1540 = vmatpush2.msra.mxu0 0.0
    %1541 = vmatprep.subr.mxu0 0.0
    %1542 = vmatpush2.msra.mxu0 0.0
    %1543 = vmatprep.subr.mxu0 0.0
    %1544 = vmatpush2.msra.mxu0 0.0
    %1545 = vmatprep.mubr.f32.mxu0 0.0
    %1546 = vmatmul.mubr.f32.gmra.mxu0 %v1476
    %v1547 = vpop.f32.mrf.mxu0
    %v1548 = vadd.f32 %v1474, %v1547
    %v1549 = vpop.f32.mrf.mxu0
    %1550 = vmatprep.mubr.f32.mxu0 0.0
    %1551 = vmatmul.mubr.f32.gmra.mxu0 %v1479
    %v1552 = vpop.f32.mrf.mxu0
    %v1553 = vadd.f32 %v1474, %v1552
    %v1554 = vpop.f32.mrf.mxu0
    %1555 = vdwg.mxu0
    %v1556 = vadd.f32 %v1001, %v1548
    %v1557 = vadd.f32 %v1002, %v1553
    %v1558 = vsel %vm171, %v1556, 0.0
    %1559 = vadd.xlane.f32.xlu0 %v1558
    %v1560 = vpop.xlane.xlu0 %1559
    %v1561 = vsel %vm171, %v1557, 0.0
    %1562 = vadd.xlane.f32.xlu0 %v1561
    %v1563 = vpop.xlane.xlu0 %1562
    %v1564 = vmul.f32 %v1560, %v758
    %v1565 = vmul.f32 %v1563, %v758
    %v1566 = vsub.f32 %v1556, %v1564
    %v1567 = vsub.f32 %v1557, %v1565
    %v1568 = vmul.f32 %v1566, %v1566
    %v1569 = vmul.f32 %v1567, %v1567
    %v1570 = vsel %vm171, %v1568, 0.0
    %1571 = vadd.xlane.f32.xlu0 %v1570
    %v1572 = vpop.xlane.xlu0 %1571
    %v1573 = vsel %vm171, %v1569, 0.0
    %1574 = vadd.xlane.f32.xlu0 %v1573
    %v1575 = vpop.xlane.xlu0 %1574
    %v1576 = vmul.f32 %v1572, %v758
    %v1577 = vmul.f32 %v1575, %v758
    %v1578 = vadd.f32 %v1576, 1e-05
    %v1579 = vadd.f32 %v1577, 1e-05
    %v1580 = vrsqrt.pop %v1578
    %v1581 = vrsqrt.pop %v1579
    %v1582 = vmul.f32 %v1566, %v1580
    %v1583 = vmul.f32 %v1567, %v1581
    %v1584 = vlaneseq
    %v1585 = vshrl.u32 %v1584, 7
    %v1586 = vsub.s32 0, %v1585
    %v1587 = vrot.slane %v1005, %v1586
    %v1588 = vmul.f32 %v1582, %v1587
    %v1589 = vmul.f32 %v1583, %v1587
    %v1590 = vlaneseq
    %v1591 = vshrl.u32 %v1590, 7
    %v1592 = vsub.s32 0, %v1591
    %v1593 = vrot.slane %v1006, %v1592
    %v1594 = vadd.f32 %v1588, %v1593
    %v1595 = vadd.f32 %v1589, %v1593
    %v1596 = vlaneseq
    %v1597 = vshrl.u32 %v1596, 7
    %v1598 = vsub.s32 0, %v1597
    %v1599 = vrot.slane %v1007, %v1598
    %v1601 = vsel %vm171, %v1594, 0
    %v1604 = vsel %vm171, %v1595, 0
    %1606 = vmatprep.subr.mxu0 0.0
    %1607 = vmatpush1.msra.mxu0 0.0
    %1608 = vmatprep.subr.mxu0 0.0
    %1609 = vmatpush1.msra.mxu0 0.0
    %1610 = vmatprep.subr.mxu0 0.0
    %1611 = vmatpush1.msra.mxu0 0.0
    %1612 = vmatprep.subr.mxu0 0.0
    %1613 = vmatpush1.msra.mxu0 0.0
    %1614 = vmatprep.subr.mxu0 0.0
    %1615 = vmatpush1.msra.mxu0 0.0
    %1616 = vmatprep.subr.mxu0 0.0
    %1617 = vmatpush1.msra.mxu0 0.0
    %1618 = vmatprep.subr.mxu0 0.0
    %1619 = vmatpush1.msra.mxu0 0.0
    %1620 = vmatprep.subr.mxu0 0.0
    %1621 = vmatpush1.msra.mxu0 0.0
    %1622 = vmatprep.subr.mxu0 0.0
    %1623 = vmatpush1.msra.mxu0 0.0
    %1624 = vmatprep.subr.mxu0 0.0
    %1625 = vmatpush1.msra.mxu0 0.0
    %1626 = vmatprep.subr.mxu0 0.0
    %1627 = vmatpush1.msra.mxu0 0.0
    %1628 = vmatprep.subr.mxu0 0.0
    %1629 = vmatpush1.msra.mxu0 0.0
    %1630 = vmatprep.subr.mxu0 0.0
    %1631 = vmatpush1.msra.mxu0 %v1022
    %1632 = vmatprep.subr.mxu0 0.0
    %1633 = vmatpush1.msra.mxu0 %v1021
    %1634 = vmatprep.subr.mxu0 0.0
    %1635 = vmatpush1.msra.mxu0 %v1020
    %1636 = vmatprep.subr.mxu0 0.0
    %1637 = vmatpush1.msra.mxu0 %v1019
    %1638 = vmatprep.subr.mxu0 0.0
    %1639 = vmatpush2.msra.mxu0 0.0
    %1640 = vmatprep.subr.mxu0 0.0
    %1641 = vmatpush2.msra.mxu0 0.0
    %1642 = vmatprep.subr.mxu0 0.0
    %1643 = vmatpush2.msra.mxu0 0.0
    %1644 = vmatprep.subr.mxu0 0.0
    %1645 = vmatpush2.msra.mxu0 0.0
    %1646 = vmatprep.subr.mxu0 0.0
    %1647 = vmatpush2.msra.mxu0 0.0
    %1648 = vmatprep.subr.mxu0 0.0
    %1649 = vmatpush2.msra.mxu0 0.0
    %1650 = vmatprep.subr.mxu0 0.0
    %1651 = vmatpush2.msra.mxu0 0.0
    %1652 = vmatprep.subr.mxu0 0.0
    %1653 = vmatpush2.msra.mxu0 0.0
    %1654 = vmatprep.subr.mxu0 0.0
    %1655 = vmatpush2.msra.mxu0 0.0
    %1656 = vmatprep.subr.mxu0 0.0
    %1657 = vmatpush2.msra.mxu0 0.0
    %1658 = vmatprep.subr.mxu0 0.0
    %1659 = vmatpush2.msra.mxu0 0.0
    %1660 = vmatprep.subr.mxu0 0.0
    %1661 = vmatpush2.msra.mxu0 0.0
    %1662 = vmatprep.subr.mxu0 0.0
    %1663 = vmatpush2.msra.mxu0 0.0
    %1664 = vmatprep.subr.mxu0 0.0
    %1665 = vmatpush2.msra.mxu0 0.0
    %1666 = vmatprep.subr.mxu0 0.0
    %1667 = vmatpush2.msra.mxu0 0.0
    %1668 = vmatprep.subr.mxu0 0.0
    %1669 = vmatpush2.msra.mxu0 0.0
    %1670 = vmatprep.mubr.f32.mxu0 0.0
    %1671 = vmatmul.mubr.f32.gmra.mxu0 %v1601
    %v1672 = vpop.f32.mrf.mxu0
    %v1673 = vadd.f32 %v1599, %v1672
    %v1674 = vpop.f32.mrf.mxu0
    %1675 = vmatprep.mubr.f32.mxu0 0.0
    %1676 = vmatmul.mubr.f32.gmra.mxu0 %v1604
    %v1677 = vpop.f32.mrf.mxu0
    %v1678 = vadd.f32 %v1599, %v1677
    %v1679 = vpop.f32.mrf.mxu0
    %1680 = vdwg.mxu0
    %v1681 = vmax.f32 %v1673, 0.0
    %v1682 = vmax.f32 %v1678, 0.0
    %v1683 = vlaneseq
    %v1684 = vshrl.u32 %v1683, 7
    %v1685 = vsub.s32 0, %v1684
    %v1686 = vrot.slane %v1008, %v1685
    %v1688 = vsel %vm448, %v1681, 0
    %v1691 = vsel %vm448, %v1682, 0
    %1693 = vmatprep.subr.mxu0 0.0
    %1694 = vmatpush1.msra.mxu0 0.0
    %1695 = vmatprep.subr.mxu0 0.0
    %1696 = vmatpush1.msra.mxu0 0.0
    %1697 = vmatprep.subr.mxu0 0.0
    %1698 = vmatpush1.msra.mxu0 0.0
    %1699 = vmatprep.subr.mxu0 0.0
    %1700 = vmatpush1.msra.mxu0 0.0
    %1701 = vmatprep.subr.mxu0 0.0
    %1702 = vmatpush1.msra.mxu0 0.0
    %1703 = vmatprep.subr.mxu0 0.0
    %1704 = vmatpush1.msra.mxu0 0.0
    %1705 = vmatprep.subr.mxu0 0.0
    %1706 = vmatpush1.msra.mxu0 0.0
    %1707 = vmatprep.subr.mxu0 0.0
    %1708 = vmatpush1.msra.mxu0 0.0
    %1709 = vmatprep.subr.mxu0 0.0
    %1710 = vmatpush1.msra.mxu0 %v1030
    %1711 = vmatprep.subr.mxu0 0.0
    %1712 = vmatpush1.msra.mxu0 %v1029
    %1713 = vmatprep.subr.mxu0 0.0
    %1714 = vmatpush1.msra.mxu0 %v1028
    %1715 = vmatprep.subr.mxu0 0.0
    %1716 = vmatpush1.msra.mxu0 %v1027
    %1717 = vmatprep.subr.mxu0 0.0
    %1718 = vmatpush1.msra.mxu0 %v1026
    %1719 = vmatprep.subr.mxu0 0.0
    %1720 = vmatpush1.msra.mxu0 %v1025
    %1721 = vmatprep.subr.mxu0 0.0
    %1722 = vmatpush1.msra.mxu0 %v1024
    %1723 = vmatprep.subr.mxu0 0.0
    %1724 = vmatpush1.msra.mxu0 %v1023
    %1725 = vmatprep.subr.mxu0 0.0
    %1726 = vmatpush2.msra.mxu0 0.0
    %1727 = vmatprep.subr.mxu0 0.0
    %1728 = vmatpush2.msra.mxu0 0.0
    %1729 = vmatprep.subr.mxu0 0.0
    %1730 = vmatpush2.msra.mxu0 0.0
    %1731 = vmatprep.subr.mxu0 0.0
    %1732 = vmatpush2.msra.mxu0 0.0
    %1733 = vmatprep.subr.mxu0 0.0
    %1734 = vmatpush2.msra.mxu0 0.0
    %1735 = vmatprep.subr.mxu0 0.0
    %1736 = vmatpush2.msra.mxu0 0.0
    %1737 = vmatprep.subr.mxu0 0.0
    %1738 = vmatpush2.msra.mxu0 0.0
    %1739 = vmatprep.subr.mxu0 0.0
    %1740 = vmatpush2.msra.mxu0 0.0
    %1741 = vmatprep.subr.mxu0 0.0
    %1742 = vmatpush2.msra.mxu0 0.0
    %1743 = vmatprep.subr.mxu0 0.0
    %1744 = vmatpush2.msra.mxu0 0.0
    %1745 = vmatprep.subr.mxu0 0.0
    %1746 = vmatpush2.msra.mxu0 0.0
    %1747 = vmatprep.subr.mxu0 0.0
    %1748 = vmatpush2.msra.mxu0 0.0
    %1749 = vmatprep.subr.mxu0 0.0
    %1750 = vmatpush2.msra.mxu0 0.0
    %1751 = vmatprep.subr.mxu0 0.0
    %1752 = vmatpush2.msra.mxu0 0.0
    %1753 = vmatprep.subr.mxu0 0.0
    %1754 = vmatpush2.msra.mxu0 0.0
    %1755 = vmatprep.subr.mxu0 0.0
    %1756 = vmatpush2.msra.mxu0 0.0
    %1757 = vmatprep.mubr.f32.mxu0 0.0
    %1758 = vmatmul.mubr.f32.gmra.mxu0 %v1688
    %v1759 = vpop.f32.mrf.mxu0
    %v1760 = vadd.f32 %v1686, %v1759
    %v1761 = vpop.f32.mrf.mxu0
    %1762 = vmatprep.mubr.f32.mxu0 0.0
    %1763 = vmatmul.mubr.f32.gmra.mxu0 %v1691
    %v1764 = vpop.f32.mrf.mxu0
    %v1765 = vadd.f32 %v1686, %v1764
    %v1766 = vpop.f32.mrf.mxu0
    %1767 = vdwg.mxu0
    %v1768 = vadd.f32 %v1594, %v1760
    %v1769 = vadd.f32 %v1595, %v1765
    %v1770 = vsel %vm171, %v1768, 0.0
    %1771 = vadd.xlane.f32.xlu0 %v1770
    %v1772 = vpop.xlane.xlu0 %1771
    %v1773 = vsel %vm171, %v1769, 0.0
    %1774 = vadd.xlane.f32.xlu0 %v1773
    %v1775 = vpop.xlane.xlu0 %1774
    %v1776 = vmul.f32 %v1772, %v758
    %v1777 = vmul.f32 %v1775, %v758
    %v1778 = vsub.f32 %v1768, %v1776
    %v1779 = vsub.f32 %v1769, %v1777
    %v1780 = vmul.f32 %v1778, %v1778
    %v1781 = vmul.f32 %v1779, %v1779
    %v1782 = vsel %vm171, %v1780, 0.0
    %1783 = vadd.xlane.f32.xlu0 %v1782
    %v1784 = vpop.xlane.xlu0 %1783
    %v1785 = vsel %vm171, %v1781, 0.0
    %1786 = vadd.xlane.f32.xlu0 %v1785
    %v1787 = vpop.xlane.xlu0 %1786
    %v1788 = vmul.f32 %v1784, %v758
    %v1789 = vmul.f32 %v1787, %v758
    %v1790 = vadd.f32 %v1788, 1e-05
    %v1791 = vadd.f32 %v1789, 1e-05
    %v1792 = vrsqrt.pop %v1790
    %v1793 = vrsqrt.pop %v1791
    %v1794 = vmul.f32 %v1778, %v1792
    %v1795 = vmul.f32 %v1779, %v1793
    %v1796 = vlaneseq
    %v1797 = vshrl.u32 %v1796, 7
    %v1798 = vsub.s32 0, %v1797
    %v1799 = vrot.slane %v1009, %v1798
    %v1800 = vmul.f32 %v1794, %v1799
    %v1801 = vmul.f32 %v1795, %v1799
    %v1802 = vlaneseq
    %v1803 = vshrl.u32 %v1802, 7
    %v1804 = vsub.s32 0, %v1803
    %v1805 = vrot.slane %v1010, %v1804
    %v1806 = vadd.f32 %v1800, %v1805
    %v1807 = vadd.f32 %v1801, %v1805
    %v1808 = vld [vmem:[#allocation2 + $0x148] sm:$0xff]
    %v1809 = vld [vmem:[#allocation2 + $0x150] sm:$0xff]
    %v1810 = vld [vmem:[#allocation2 + $0x158] sm:$0xff]
    %v1811 = vld [vmem:[#allocation2 + $0x160] sm:$0xff]
    %v1812 = vld [vmem:[#allocation2 + $0x188] sm:$0x1]
    %v1813 = vlaneseq
    %v1814 = vshrl.u32 %v1813, 7
    %v1815 = vsub.s32 0, %v1814
    %v1816 = vrot.slane %v1812, %v1815
    %v1818 = vsel %vm171, %v1806, 0
    %v1821 = vsel %vm171, %v1807, 0
    %1823 = vmatprep.subr.mxu0 0.0
    %1824 = vmatpush1.msra.mxu0 0.0
    %1825 = vmatprep.subr.mxu0 0.0
    %1826 = vmatpush1.msra.mxu0 0.0
    %1827 = vmatprep.subr.mxu0 0.0
    %1828 = vmatpush1.msra.mxu0 0.0
    %1829 = vmatprep.subr.mxu0 0.0
    %1830 = vmatpush1.msra.mxu0 0.0
    %1831 = vmatprep.subr.mxu0 0.0
    %1832 = vmatpush1.msra.mxu0 0.0
    %1833 = vmatprep.subr.mxu0 0.0
    %1834 = vmatpush1.msra.mxu0 0.0
    %1835 = vmatprep.subr.mxu0 0.0
    %1836 = vmatpush1.msra.mxu0 0.0
    %1837 = vmatprep.subr.mxu0 0.0
    %1838 = vmatpush1.msra.mxu0 0.0
    %1839 = vmatprep.subr.mxu0 0.0
    %1840 = vmatpush1.msra.mxu0 0.0
    %1841 = vmatprep.subr.mxu0 0.0
    %1842 = vmatpush1.msra.mxu0 0.0
    %1843 = vmatprep.subr.mxu0 0.0
    %1844 = vmatpush1.msra.mxu0 0.0
    %1845 = vmatprep.subr.mxu0 0.0
    %1846 = vmatpush1.msra.mxu0 0.0
    %1847 = vmatprep.subr.mxu0 0.0
    %1848 = vmatpush1.msra.mxu0 %v1811
    %1849 = vmatprep.subr.mxu0 0.0
    %1850 = vmatpush1.msra.mxu0 %v1810
    %1851 = vmatprep.subr.mxu0 0.0
    %1852 = vmatpush1.msra.mxu0 %v1809
    %1853 = vmatprep.subr.mxu0 0.0
    %1854 = vmatpush1.msra.mxu0 %v1808
    %1855 = vmatprep.subr.mxu0 0.0
    %1856 = vmatpush2.msra.mxu0 0.0
    %1857 = vmatprep.subr.mxu0 0.0
    %1858 = vmatpush2.msra.mxu0 0.0
    %1859 = vmatprep.subr.mxu0 0.0
    %1860 = vmatpush2.msra.mxu0 0.0
    %1861 = vmatprep.subr.mxu0 0.0
    %1862 = vmatpush2.msra.mxu0 0.0
    %1863 = vmatprep.subr.mxu0 0.0
    %1864 = vmatpush2.msra.mxu0 0.0
    %1865 = vmatprep.subr.mxu0 0.0
    %1866 = vmatpush2.msra.mxu0 0.0
    %1867 = vmatprep.subr.mxu0 0.0
    %1868 = vmatpush2.msra.mxu0 0.0
    %1869 = vmatprep.subr.mxu0 0.0
    %1870 = vmatpush2.msra.mxu0 0.0
    %1871 = vmatprep.subr.mxu0 0.0
    %1872 = vmatpush2.msra.mxu0 0.0
    %1873 = vmatprep.subr.mxu0 0.0
    %1874 = vmatpush2.msra.mxu0 0.0
    %1875 = vmatprep.subr.mxu0 0.0
    %1876 = vmatpush2.msra.mxu0 0.0
    %1877 = vmatprep.subr.mxu0 0.0
    %1878 = vmatpush2.msra.mxu0 0.0
    %1879 = vmatprep.subr.mxu0 0.0
    %1880 = vmatpush2.msra.mxu0 0.0
    %1881 = vmatprep.subr.mxu0 0.0
    %1882 = vmatpush2.msra.mxu0 0.0
    %1883 = vmatprep.subr.mxu0 0.0
    %1884 = vmatpush2.msra.mxu0 0.0
    %1885 = vmatprep.subr.mxu0 0.0
    %1886 = vmatpush2.msra.mxu0 0.0
    %1887 = vmatprep.mubr.f32.mxu0 0.0
    %1888 = vmatmul.mubr.f32.gmra.mxu0 %v1818
    %v1889 = vpop.f32.mrf.mxu0
    %v1890 = vadd.f32 %v1816, %v1889
    %v1891 = vpop.f32.mrf.mxu0
    %1892 = vmatprep.mubr.f32.mxu0 0.0
    %1893 = vmatmul.mubr.f32.gmra.mxu0 %v1821
    %v1894 = vpop.f32.mrf.mxu0
    %v1895 = vadd.f32 %v1816, %v1894
    %v1896 = vpop.f32.mrf.mxu0
    %1897 = vdwg.mxu0
    %1898 = vst [vmem:[#allocation5] sm:$0xff] %v1890
    %1899 = vst [vmem:[#allocation5 + $0x8] sm:$0xff] %v1895
    // Predicated region
    $region14: #{tpu_custom_call.1} parent=1 // pred_check
      _
    $region15: #{tpu_custom_call.1} parent=1 // pred_check_branch
      %1901 = sbr.rel (0) target = $region17
    $region16: #{tpu_custom_call.1} parent=1 // pred_region
      %s1903 = ssub.s32 256, 256
      %1904 = vsyncadd [#allocation4], %s1903
      %s1905 = sshll.u32 [#allocation5], 4
      %s1906 = int_to_ptr.vmem [resolvable:$true] %s1905
      %1911 = dma.vmem_to_hbm [thread:$0]  %s1906, 256, %s2, [#allocation4], 128, 128, 8
    $region17: #{tpu_custom_call.1} parent=1 // pred_fallthru
      _
    // Predicated region
    $region18: #{tpu_custom_call.1} parent=1 // pred_check
      _
    $region19: #{tpu_custom_call.1} parent=1 // pred_check_branch
      %1913 = sbr.rel (0) target = $region21
    $region20: #{tpu_custom_call.1} parent=1 // pred_region
      %1914 = dma.done [#allocation4], 256
    $region21: #{tpu_custom_call.1} parent=1 // pred_fallthru
      _
    %1915 = vsyncpa [#allocation3], 1
    %1916 = vsyncpa [#allocation4], 1

</llo_original>
